<compile_context>
chip_gen: v5e
topology: v5e:2x2
jax: 0.10.0
libtpu: 0.0.40
codegen_flags: <defaults>
</compile_context>

<pallas_src>
import functools

import jax
import jax.numpy as jnp
from jax.experimental import pallas as pl
from jax.experimental.pallas import tpu as pltpu


# ---------------------------------------------------------------------------
# Fused kernel: one grid step == one batch image.
# ---------------------------------------------------------------------------
def _tfim_fused_kernel(t0_ref, t1_ref,
                       wsub_ref, bsub_ref,
                       we0_ref, be0_ref,
                       we1_ref, be1_ref,
                       wcat_ref, bcat_ref,
                       wred_ref, bred_ref,
                       o_ref,
                       pad_a, pad_b,
                       *, H, W, halo):
    HW = H * W
    C = t0_ref.shape[1]

    t0 = t0_ref[0]                       # (C, HW) f32, lane-dense (HW lanes)
    t1 = t1_ref[0]

    # Column-validity masks: the (C, HW) layout flattens rows, so a +/-1 column
    # shift wraps across image rows; mask those positions to zero.
    col = jax.lax.broadcasted_iota(jnp.int32, (1, HW), 1) % W
    not_first_col = col > 0              # needed for dx == 0 taps
    not_last_col = col < (W - 1)         # needed for dx == 2 taps

    # Zero the scratch halos once per invocation (interiors are always fully
    # overwritten before use, so no cross-grid-step state is relied upon).
    zeros_halo = jnp.zeros((C, halo), jnp.float32)
    for ref in (pad_a, pad_b):
        ref[:, :halo] = zeros_halo
        ref[:, halo + HW:] = zeros_halo

    def set_interior(ref, x):
        # aligned store: offset `halo` (=128) and width HW are lane-aligned
        ref[:, halo:halo + HW] = x

    def tap(ref, k):
        dy, dx = k // 3, k % 3
        shift = (dy - 1) * W + (dx - 1)
        t = ref[:, halo + shift: halo + shift + HW]          # (C, HW)
        if dx == 0:
            t = jnp.where(not_first_col, t, 0.0)
        elif dx == 2:
            t = jnp.where(not_last_col, t, 0.0)
        return t

    def conv3x3(refs, w_ref, b_ref):
        """One im2col matmul: (Cout, 9*len(refs)*C) @ (9*len(refs)*C, HW)."""
        pieces = [tap(r, k) for k in range(9) for r in refs]  # tap-major
        patches = jnp.concatenate(pieces, axis=0).astype(jnp.bfloat16)
        acc = jnp.dot(w_ref[...], patches, preferred_element_type=jnp.float32)
        return jnp.maximum(acc + b_ref[...], 0.0)             # (Cout, HW) f32

    # sub_feature = ReLU(BN(Conv3x3(|t0 - t1|)))
    set_interior(pad_a, jnp.abs(t0 - t1))
    sub = conv3x3([pad_a], wsub_ref, bsub_ref)

    # enhance branches: ReLU(BN(Conv3x3(t_i * (1 + sub))))
    set_interior(pad_a, t0 * (1.0 + sub))
    set_interior(pad_b, t1 * (1.0 + sub))
    e0 = conv3x3([pad_a], we0_ref, be0_ref)
    e1 = conv3x3([pad_b], we1_ref, be1_ref)

    # cat conv on channel-concat(e0, e1) (per-tap [e0 C | e1 C] ordering)
    set_interior(pad_a, e0)
    set_interior(pad_b, e1)
    cat = conv3x3([pad_a, pad_b], wcat_ref, bcat_ref)

    # residual + 1x1 channel reduction + BN + ReLU
    x = (cat + sub).astype(jnp.bfloat16)
    red = jnp.dot(wred_ref[...], x, preferred_element_type=jnp.float32)
    o_ref[0] = jnp.maximum(red + bred_ref[...], 0.0)          # (Cout, HW)


# ---------------------------------------------------------------------------
# Wrapper
# ---------------------------------------------------------------------------
def _img_spec(c, hw):
    return pl.BlockSpec((1, c, hw), lambda n: (n, 0, 0))


def _const_spec(shape):
    zeros = (0,) * len(shape)
    return pl.BlockSpec(tuple(shape), lambda n, _z=zeros: _z)


@jax.jit
def tfim_forward(t0_nchw, t1_nchw, params):
    N, C, H, W = t0_nchw.shape
    HW = H * W
    HALO = 128
    assert W + 1 <= HALO, "halo buffer too narrow for this image width"

    t0 = t0_nchw.reshape(N, C, HW).astype(jnp.float32)   # NCHW -> (N, C, HW)
    t1 = t1_nchw.reshape(N, C, HW).astype(jnp.float32)

    wsub, bsub = params["sub"]
    we0, be0 = params["enh"][0]
    we1, be1 = params["enh"][1]
    wcat, bcat = params["cat"]
    wred, bred = params["red"]
    Cout = wred.shape[0]

    kernel = functools.partial(_tfim_fused_kernel, H=H, W=W, halo=HALO)
    out = pl.pallas_call(
        kernel,
        out_shape=jax.ShapeDtypeStruct((N, Cout, HW), jnp.float32),
        grid=(N,),
        in_specs=[
            _img_spec(C, HW), _img_spec(C, HW),
            _const_spec(wsub.shape), _const_spec(bsub.shape),
            _const_spec(we0.shape), _const_spec(be0.shape),
            _const_spec(we1.shape), _const_spec(be1.shape),
            _const_spec(wcat.shape), _const_spec(bcat.shape),
            _const_spec(wred.shape), _const_spec(bred.shape),
        ],
        out_specs=pl.BlockSpec((1, Cout, HW), lambda n: (n, 0, 0)),
        scratch_shapes=[pltpu.VMEM((C, HW + 2 * HALO), jnp.float32),
                        pltpu.VMEM((C, HW + 2 * HALO), jnp.float32)],
        compiler_params=pltpu.CompilerParams(
            dimension_semantics=("parallel",)),
    )(t0, t1, wsub, bsub, we0, be0, we1, be1, wcat, bcat, wred, bred)
    return out.reshape(N, Cout, H, W)                    # back to NCHW


# ---------------------------------------------------------------------------
# Parameter construction: BN (inference) folded into conv weight + bias;
# weights pre-transposed to (Cout, taps*Cin) and stored in bf16 for the MXU.
# ---------------------------------------------------------------------------
def make_convbnact_params(key, ksize, cin, cout, eps=1e-5):
    ks = jax.random.split(key, 6)
    taps = ksize * ksize
    w = jax.random.normal(ks[0], (taps, cin, cout), jnp.float32) * 0.1
    b = jax.random.normal(ks[1], (cout,), jnp.float32) * 0.1
    gamma = 1.0 + 0.1 * jax.random.normal(ks[2], (cout,), jnp.float32)
    beta = 0.1 * jax.random.normal(ks[3], (cout,), jnp.float32)
    mean = 0.1 * jax.random.normal(ks[4], (cout,), jnp.float32)
    var = jax.random.uniform(ks[5], (cout,), jnp.float32, minval=0.5, maxval=1.5)
    scale = gamma / jnp.sqrt(var + eps)
    shift = (b - mean) * scale + beta
    w = w * scale[None, None, :]                         # fold BN scale into W
    wT = jnp.transpose(w, (2, 0, 1)).reshape(cout, taps * cin).astype(jnp.bfloat16)
    bias = shift.reshape(cout, 1).astype(jnp.float32)    # BN shift as bias
    return wT, bias


def make_tfim_params(key, in_channel, out_channel, num_temporal=2):
    assert num_temporal == 2  # fused kernel is specialized to two temporal frames
    ks = jax.random.split(key, 3 + num_temporal)
    return {
        "sub": make_convbnact_params(ks[0], 3, in_channel, in_channel),
        "cat": make_convbnact_params(ks[1], 3, in_channel * num_temporal, in_channel),
        "red": make_convbnact_params(ks[2], 1, in_channel, out_channel),
        "enh": [make_convbnact_params(ks[3 + i], 3, in_channel, in_channel)
                for i in range(num_temporal)],
    }


# ---------------------------------------------------------------------------
# Pure-JAX reference (same folded-BN / bf16-matmul numerics) for verification
# ---------------------------------------------------------------------------
def _conv_bn_relu_ref(x_nchw, wT, bias, ksize):
    cout = wT.shape[0]
    cin = wT.shape[1] // (ksize * ksize)
    w_oihw = wT.reshape(cout, ksize, ksize, cin).transpose(0, 3, 1, 2)  # bf16
    y = jax.lax.conv_general_dilated(
        x_nchw.astype(jnp.bfloat16), w_oihw, (1, 1), "SAME",
        dimension_numbers=("NCHW", "OIHW", "NCHW"),
        preferred_element_type=jnp.float32)
    return jnp.maximum(y + bias.reshape(1, cout, 1, 1), 0.0)


def tfim_forward_ref(t0, t1, params):
    t0 = t0.astype(jnp.float32)
    t1 = t1.astype(jnp.float32)
    sub = _conv_bn_relu_ref(jnp.abs(t0 - t1), *params["sub"], 3)
    e0 = _conv_bn_relu_ref(t0 * (1.0 + sub), *params["enh"][0], 3)
    e1 = _conv_bn_relu_ref(t1 * (1.0 + sub), *params["enh"][1], 3)
    cat = _conv_bn_relu_ref(jnp.concatenate([e0, e1], axis=1), *params["cat"], 3)
    return _conv_bn_relu_ref(cat + sub, *params["red"], 1)


# ---------------------------------------------------------------------------
if __name__ == "__main__":
    N, C_IN, C_OUT, H, W = 2, 8, 4, 16, 16

    key = jax.random.PRNGKey(0)
    k_t0, k_t1, k_p = jax.random.split(key, 3)
    t0 = jax.random.normal(k_t0, (N, C_IN, H, W), jnp.float32)   # NCHW inputs
    t1 = jax.random.normal(k_t1, (N, C_IN, H, W), jnp.float32)
    params = make_tfim_params(k_p, C_IN, C_OUT, num_temporal=2)

    out = jax.block_until_ready(tfim_forward(t0, t1, params))
    assert out.shape == (N, C_OUT, H, W), out.shape

    ref = jax.block_until_ready(tfim_forward_ref(t0, t1, params))
    # bf16 matmul operands (f32 accumulation) in both paths -> loose-ish tol.
    assert jnp.allclose(out, ref, atol=2e-2, rtol=2e-2), float(
        jnp.max(jnp.abs(out - ref)))

    print("KERNEL_OK")
</pallas_src>

<mosaic_0001>
module attributes {stable_mosaic.version = 11 : i64} {
  func.func @_tfim_fused_kernel(%arg0: i32, %arg1: memref<1x8x256xf32, #tpu.memory_space<vmem>>, %arg2: memref<1x8x256xf32, #tpu.memory_space<vmem>>, %arg3: memref<8x72xbf16, #tpu.memory_space<vmem>>, %arg4: memref<8x1xf32, #tpu.memory_space<vmem>>, %arg5: memref<8x72xbf16, #tpu.memory_space<vmem>>, %arg6: memref<8x1xf32, #tpu.memory_space<vmem>>, %arg7: memref<8x72xbf16, #tpu.memory_space<vmem>>, %arg8: memref<8x1xf32, #tpu.memory_space<vmem>>, %arg9: memref<8x144xbf16, #tpu.memory_space<vmem>>, %arg10: memref<8x1xf32, #tpu.memory_space<vmem>>, %arg11: memref<4x8xbf16, #tpu.memory_space<vmem>>, %arg12: memref<4x1xf32, #tpu.memory_space<vmem>>, %arg13: memref<1x4x256xf32, #tpu.memory_space<vmem>>, %arg14: memref<8x512xf32, #tpu.memory_space<vmem>>, %arg15: memref<8x512xf32, #tpu.memory_space<vmem>>) attributes {dimension_semantics = [#tpu.dimension_semantics<parallel>], iteration_bounds = array<i64: 2>, scalar_prefetch = 0 : i64, scratch_operands = 2 : i64, tpu.core_type = #tpu.core_type<tc>, window_params = [{transform_indices = @transform_0, window_bounds = array<i64: 1, 8, 256>}, {transform_indices = @transform_1, window_bounds = array<i64: 1, 8, 256>}, {pipeline_mode = #tpu.pipeline_mode<synchronous>, transform_indices = @transform_2, window_bounds = array<i64: 8, 72>}, {pipeline_mode = #tpu.pipeline_mode<synchronous>, transform_indices = @transform_3, window_bounds = array<i64: 8, 1>}, {pipeline_mode = #tpu.pipeline_mode<synchronous>, transform_indices = @transform_4, window_bounds = array<i64: 8, 72>}, {pipeline_mode = #tpu.pipeline_mode<synchronous>, transform_indices = @transform_5, window_bounds = array<i64: 8, 1>}, {pipeline_mode = #tpu.pipeline_mode<synchronous>, transform_indices = @transform_6, window_bounds = array<i64: 8, 72>}, {pipeline_mode = #tpu.pipeline_mode<synchronous>, transform_indices = @transform_7, window_bounds = array<i64: 8, 1>}, {pipeline_mode = #tpu.pipeline_mode<synchronous>, transform_indices = @transform_8, window_bounds = array<i64: 8, 144>}, {pipeline_mode = #tpu.pipeline_mode<synchronous>, transform_indices = @transform_9, window_bounds = array<i64: 8, 1>}, {pipeline_mode = #tpu.pipeline_mode<synchronous>, transform_indices = @transform_10, window_bounds = array<i64: 4, 8>}, {pipeline_mode = #tpu.pipeline_mode<synchronous>, transform_indices = @transform_11, window_bounds = array<i64: 4, 1>}, {transform_indices = @transform_12, window_bounds = array<i64: 1, 4, 256>}]} {
    %c0 = arith.constant 0 : index
    %c0_0 = arith.constant 0 : index
    %c0_1 = arith.constant 0 : index
    %0 = vector.load %arg1[%c0, %c0_0, %c0_1] : memref<1x8x256xf32, #tpu.memory_space<vmem>>, vector<1x8x256xf32>
    %1 = vector.shape_cast %0 : vector<1x8x256xf32> to vector<8x256xf32>
    %c0_2 = arith.constant 0 : index
    %c0_3 = arith.constant 0 : index
    %c0_4 = arith.constant 0 : index
    %2 = vector.load %arg2[%c0_2, %c0_3, %c0_4] : memref<1x8x256xf32, #tpu.memory_space<vmem>>, vector<1x8x256xf32>
    %3 = vector.shape_cast %2 : vector<1x8x256xf32> to vector<8x256xf32>
    %4 = tpu.iota {dimensions = array<i32: 1>} : vector<1x256xi32>
    %c16_i32 = arith.constant 16 : i32
    %c0_i32 = arith.constant 0 : i32
    %5 = arith.cmpi eq, %c16_i32, %c0_i32 : i32
    %c1_i32 = arith.constant 1 : i32
    %6 = arith.select %5, %c1_i32, %c16_i32 : i32
    %7 = vector.broadcast %6 : i32 to vector<1x256xi32>
    %8 = arith.remsi %4, %7 : vector<1x256xi32>
    %c0_i32_5 = arith.constant 0 : i32
    %9 = vector.broadcast %c0_i32_5 : i32 to vector<1x256xi32>
    %10 = arith.cmpi ne, %8, %9 : vector<1x256xi32>
    %c0_i32_6 = arith.constant 0 : i32
    %11 = vector.broadcast %c0_i32_6 : i32 to vector<1x256xi32>
    %12 = arith.cmpi slt, %8, %11 : vector<1x256xi32>
    %c0_i32_7 = arith.constant 0 : i32
    %13 = arith.cmpi slt, %6, %c0_i32_7 : i32
    %14 = vector.broadcast %13 : i1 to vector<1x256xi1>
    %15 = vector.broadcast %14 : vector<1x256xi1> to vector<1x256xi1>
    %16 = arith.xori %12, %15 : vector<1x256xi1>
    %17 = arith.andi %16, %10 : vector<1x256xi1>
    %18 = vector.broadcast %6 : i32 to vector<1x256xi32>
    %19 = arith.addi %8, %18 : vector<1x256xi32>
    %20 = arith.select %17, %19, %8 : vector<1x256xi1>, vector<1x256xi32>
    %c0_i32_8 = arith.constant 0 : i32
    %21 = vector.broadcast %c0_i32_8 : i32 to vector<1x256xi32>
    %22 = arith.cmpi sgt, %20, %21 : vector<1x256xi32>
    %c15_i32 = arith.constant 15 : i32
    %23 = vector.broadcast %c15_i32 : i32 to vector<1x256xi32>
    %24 = arith.cmpi slt, %20, %23 : vector<1x256xi32>
    %cst = arith.constant 0.000000e+00 : f32
    %25 = vector.broadcast %cst : f32 to vector<8x128xf32>
    %c0_9 = arith.constant 0 : index
    %c0_10 = arith.constant 0 : index
    %26 = vector.load %arg14[%c0_9, %c0_10] : memref<8x512xf32, #tpu.memory_space<vmem>>, vector<8x128xf32>
    tpu.vector_store %arg14[%c0_9, %c0_10], %25 {strides = array<i32>} : memref<8x512xf32, #tpu.memory_space<vmem>>, vector<8x128xf32>,
    %c0_11 = arith.constant 0 : index
    %c384 = arith.constant 384 : index
    %27 = vector.load %arg14[%c0_11, %c384] : memref<8x512xf32, #tpu.memory_space<vmem>>, vector<8x128xf32>
    tpu.vector_store %arg14[%c0_11, %c384], %25 {strides = array<i32>} : memref<8x512xf32, #tpu.memory_space<vmem>>, vector<8x128xf32>,
    %c0_12 = arith.constant 0 : index
    %c0_13 = arith.constant 0 : index
    %28 = vector.load %arg15[%c0_12, %c0_13] : memref<8x512xf32, #tpu.memory_space<vmem>>, vector<8x128xf32>
    tpu.vector_store %arg15[%c0_12, %c0_13], %25 {strides = array<i32>} : memref<8x512xf32, #tpu.memory_space<vmem>>, vector<8x128xf32>,
    %c0_14 = arith.constant 0 : index
    %c384_15 = arith.constant 384 : index
    %29 = vector.load %arg15[%c0_14, %c384_15] : memref<8x512xf32, #tpu.memory_space<vmem>>, vector<8x128xf32>
    tpu.vector_store %arg15[%c0_14, %c384_15], %25 {strides = array<i32>} : memref<8x512xf32, #tpu.memory_space<vmem>>, vector<8x128xf32>,
    %30 = arith.subf %1, %3 : vector<8x256xf32>
    %31 = math.absf %30 : vector<8x256xf32>
    %c0_16 = arith.constant 0 : index
    %c128 = arith.constant 128 : index
    %32 = vector.load %arg14[%c0_16, %c128] : memref<8x512xf32, #tpu.memory_space<vmem>>, vector<8x256xf32>
    tpu.vector_store %arg14[%c0_16, %c128], %31 {strides = array<i32>} : memref<8x512xf32, #tpu.memory_space<vmem>>, vector<8x256xf32>,
    %c0_17 = arith.constant 0 : index
    %c111 = arith.constant 111 : index
    %33 = vector.load %arg14[%c0_17, %c111] : memref<8x512xf32, #tpu.memory_space<vmem>>, vector<8x256xf32>
    %cst_18 = arith.constant 0.000000e+00 : f32
    %34 = vector.shape_cast %22 : vector<1x256xi1> to vector<1x256xi1>
    %35 = vector.broadcast %34 : vector<1x256xi1> to vector<8x256xi1>
    %36 = vector.broadcast %cst_18 : f32 to vector<8x256xf32>
    %37 = arith.select %35, %33, %36 : vector<8x256xi1>, vector<8x256xf32>
    %c0_19 = arith.constant 0 : index
    %c112 = arith.constant 112 : index
    %38 = vector.load %arg14[%c0_19, %c112] : memref<8x512xf32, #tpu.memory_space<vmem>>, vector<8x256xf32>
    %c0_20 = arith.constant 0 : index
    %c113 = arith.constant 113 : index
    %39 = vector.load %arg14[%c0_20, %c113] : memref<8x512xf32, #tpu.memory_space<vmem>>, vector<8x256xf32>
    %cst_21 = arith.constant 0.000000e+00 : f32
    %40 = vector.shape_cast %24 : vector<1x256xi1> to vector<1x256xi1>
    %41 = vector.broadcast %40 : vector<1x256xi1> to vector<8x256xi1>
    %42 = vector.broadcast %cst_21 : f32 to vector<8x256xf32>
    %43 = arith.select %41, %39, %42 : vector<8x256xi1>, vector<8x256xf32>
    %c0_22 = arith.constant 0 : index
    %c127 = arith.constant 127 : index
    %44 = vector.load %arg14[%c0_22, %c127] : memref<8x512xf32, #tpu.memory_space<vmem>>, vector<8x256xf32>
    %cst_23 = arith.constant 0.000000e+00 : f32
    %45 = vector.shape_cast %22 : vector<1x256xi1> to vector<1x256xi1>
    %46 = vector.broadcast %45 : vector<1x256xi1> to vector<8x256xi1>
    %47 = vector.broadcast %cst_23 : f32 to vector<8x256xf32>
    %48 = arith.select %46, %44, %47 : vector<8x256xi1>, vector<8x256xf32>
    %c0_24 = arith.constant 0 : index
    %c128_25 = arith.constant 128 : index
    %49 = vector.load %arg14[%c0_24, %c128_25] : memref<8x512xf32, #tpu.memory_space<vmem>>, vector<8x256xf32>
    %c0_26 = arith.constant 0 : index
    %c129 = arith.constant 129 : index
    %50 = vector.load %arg14[%c0_26, %c129] : memref<8x512xf32, #tpu.memory_space<vmem>>, vector<8x256xf32>
    %cst_27 = arith.constant 0.000000e+00 : f32
    %51 = vector.shape_cast %24 : vector<1x256xi1> to vector<1x256xi1>
    %52 = vector.broadcast %51 : vector<1x256xi1> to vector<8x256xi1>
    %53 = vector.broadcast %cst_27 : f32 to vector<8x256xf32>
    %54 = arith.select %52, %50, %53 : vector<8x256xi1>, vector<8x256xf32>
    %c0_28 = arith.constant 0 : index
    %c143 = arith.constant 143 : index
    %55 = vector.load %arg14[%c0_28, %c143] : memref<8x512xf32, #tpu.memory_space<vmem>>, vector<8x256xf32>
    %cst_29 = arith.constant 0.000000e+00 : f32
    %56 = vector.shape_cast %22 : vector<1x256xi1> to vector<1x256xi1>
    %57 = vector.broadcast %56 : vector<1x256xi1> to vector<8x256xi1>
    %58 = vector.broadcast %cst_29 : f32 to vector<8x256xf32>
    %59 = arith.select %57, %55, %58 : vector<8x256xi1>, vector<8x256xf32>
    %c0_30 = arith.constant 0 : index
    %c144 = arith.constant 144 : index
    %60 = vector.load %arg14[%c0_30, %c144] : memref<8x512xf32, #tpu.memory_space<vmem>>, vector<8x256xf32>
    %c0_31 = arith.constant 0 : index
    %c145 = arith.constant 145 : index
    %61 = vector.load %arg14[%c0_31, %c145] : memref<8x512xf32, #tpu.memory_space<vmem>>, vector<8x256xf32>
    %cst_32 = arith.constant 0.000000e+00 : f32
    %62 = vector.shape_cast %24 : vector<1x256xi1> to vector<1x256xi1>
    %63 = vector.broadcast %62 : vector<1x256xi1> to vector<8x256xi1>
    %64 = vector.broadcast %cst_32 : f32 to vector<8x256xf32>
    %65 = arith.select %63, %61, %64 : vector<8x256xi1>, vector<8x256xf32>
    %66 = tpu.concatenate %37, %38, %43, %48, %49, %54, %59, %60, %65 in 0 : vector<8x256xf32>, vector<8x256xf32>, vector<8x256xf32>, vector<8x256xf32>, vector<8x256xf32>, vector<8x256xf32>, vector<8x256xf32>, vector<8x256xf32>, vector<8x256xf32> -> vector<72x256xf32>
    %67 = arith.truncf %66 : vector<72x256xf32> to vector<72x256xbf16>
    %c0_33 = arith.constant 0 : index
    %c0_34 = arith.constant 0 : index
    %68 = vector.load %arg3[%c0_33, %c0_34] : memref<8x72xbf16, #tpu.memory_space<vmem>>, vector<8x72xbf16>
    %cst_35 = arith.constant dense<0.000000e+00> : vector<8x256xf32>
    %69 = tpu.matmul %68, %67, %cst_35 {dimension_numbers = #tpu.dot_dimension_numbers<[1], [0], [0], [1], [0, 0, 1, 1], [], []>} : vector<8x72xbf16>, vector<72x256xbf16>, vector<8x256xf32> -> vector<8x256xf32>
    %c0_36 = arith.constant 0 : index
    %c0_37 = arith.constant 0 : index
    %70 = vector.load %arg4[%c0_36, %c0_37] : memref<8x1xf32, #tpu.memory_space<vmem>>, vector<8x1xf32>
    %71 = vector.broadcast %70 : vector<8x1xf32> to vector<8x256xf32>
    %72 = arith.addf %69, %71 : vector<8x256xf32>
    %cst_38 = arith.constant 0.000000e+00 : f32
    %73 = vector.broadcast %cst_38 : f32 to vector<8x256xf32>
    %74 = arith.maximumf %72, %73 : vector<8x256xf32>
    %cst_39 = arith.constant 1.000000e+00 : f32
    %75 = vector.broadcast %cst_39 : f32 to vector<8x256xf32>
    %76 = arith.addf %75, %74 : vector<8x256xf32>
    %77 = arith.mulf %1, %76 : vector<8x256xf32>
    %c0_40 = arith.constant 0 : index
    %c128_41 = arith.constant 128 : index
    %78 = vector.load %arg14[%c0_40, %c128_41] : memref<8x512xf32, #tpu.memory_space<vmem>>, vector<8x256xf32>
    tpu.vector_store %arg14[%c0_40, %c128_41], %77 {strides = array<i32>} : memref<8x512xf32, #tpu.memory_space<vmem>>, vector<8x256xf32>,
    %cst_42 = arith.constant 1.000000e+00 : f32
    %79 = vector.broadcast %cst_42 : f32 to vector<8x256xf32>
    %80 = arith.addf %79, %74 : vector<8x256xf32>
    %81 = arith.mulf %3, %80 : vector<8x256xf32>
    %c0_43 = arith.constant 0 : index
    %c128_44 = arith.constant 128 : index
    %82 = vector.load %arg15[%c0_43, %c128_44] : memref<8x512xf32, #tpu.memory_space<vmem>>, vector<8x256xf32>
    tpu.vector_store %arg15[%c0_43, %c128_44], %81 {strides = array<i32>} : memref<8x512xf32, #tpu.memory_space<vmem>>, vector<8x256xf32>,
    %c0_45 = arith.constant 0 : index
    %c111_46 = arith.constant 111 : index
    %83 = vector.load %arg14[%c0_45, %c111_46] : memref<8x512xf32, #tpu.memory_space<vmem>>, vector<8x256xf32>
    %cst_47 = arith.constant 0.000000e+00 : f32
    %84 = vector.shape_cast %22 : vector<1x256xi1> to vector<1x256xi1>
    %85 = vector.broadcast %84 : vector<1x256xi1> to vector<8x256xi1>
    %86 = vector.broadcast %cst_47 : f32 to vector<8x256xf32>
    %87 = arith.select %85, %83, %86 : vector<8x256xi1>, vector<8x256xf32>
    %c0_48 = arith.constant 0 : index
    %c112_49 = arith.constant 112 : index
    %88 = vector.load %arg14[%c0_48, %c112_49] : memref<8x512xf32, #tpu.memory_space<vmem>>, vector<8x256xf32>
    %c0_50 = arith.constant 0 : index
    %c113_51 = arith.constant 113 : index
    %89 = vector.load %arg14[%c0_50, %c113_51] : memref<8x512xf32, #tpu.memory_space<vmem>>, vector<8x256xf32>
    %cst_52 = arith.constant 0.000000e+00 : f32
    %90 = vector.shape_cast %24 : vector<1x256xi1> to vector<1x256xi1>
    %91 = vector.broadcast %90 : vector<1x256xi1> to vector<8x256xi1>
    %92 = vector.broadcast %cst_52 : f32 to vector<8x256xf32>
    %93 = arith.select %91, %89, %92 : vector<8x256xi1>, vector<8x256xf32>
    %c0_53 = arith.constant 0 : index
    %c127_54 = arith.constant 127 : index
    %94 = vector.load %arg14[%c0_53, %c127_54] : memref<8x512xf32, #tpu.memory_space<vmem>>, vector<8x256xf32>
    %cst_55 = arith.constant 0.000000e+00 : f32
    %95 = vector.shape_cast %22 : vector<1x256xi1> to vector<1x256xi1>
    %96 = vector.broadcast %95 : vector<1x256xi1> to vector<8x256xi1>
    %97 = vector.broadcast %cst_55 : f32 to vector<8x256xf32>
    %98 = arith.select %96, %94, %97 : vector<8x256xi1>, vector<8x256xf32>
    %c0_56 = arith.constant 0 : index
    %c128_57 = arith.constant 128 : index
    %99 = vector.load %arg14[%c0_56, %c128_57] : memref<8x512xf32, #tpu.memory_space<vmem>>, vector<8x256xf32>
    %c0_58 = arith.constant 0 : index
    %c129_59 = arith.constant 129 : index
    %100 = vector.load %arg14[%c0_58, %c129_59] : memref<8x512xf32, #tpu.memory_space<vmem>>, vector<8x256xf32>
    %cst_60 = arith.constant 0.000000e+00 : f32
    %101 = vector.shape_cast %24 : vector<1x256xi1> to vector<1x256xi1>
    %102 = vector.broadcast %101 : vector<1x256xi1> to vector<8x256xi1>
    %103 = vector.broadcast %cst_60 : f32 to vector<8x256xf32>
    %104 = arith.select %102, %100, %103 : vector<8x256xi1>, vector<8x256xf32>
    %c0_61 = arith.constant 0 : index
    %c143_62 = arith.constant 143 : index
    %105 = vector.load %arg14[%c0_61, %c143_62] : memref<8x512xf32, #tpu.memory_space<vmem>>, vector<8x256xf32>
    %cst_63 = arith.constant 0.000000e+00 : f32
    %106 = vector.shape_cast %22 : vector<1x256xi1> to vector<1x256xi1>
    %107 = vector.broadcast %106 : vector<1x256xi1> to vector<8x256xi1>
    %108 = vector.broadcast %cst_63 : f32 to vector<8x256xf32>
    %109 = arith.select %107, %105, %108 : vector<8x256xi1>, vector<8x256xf32>
    %c0_64 = arith.constant 0 : index
    %c144_65 = arith.constant 144 : index
    %110 = vector.load %arg14[%c0_64, %c144_65] : memref<8x512xf32, #tpu.memory_space<vmem>>, vector<8x256xf32>
    %c0_66 = arith.constant 0 : index
    %c145_67 = arith.constant 145 : index
    %111 = vector.load %arg14[%c0_66, %c145_67] : memref<8x512xf32, #tpu.memory_space<vmem>>, vector<8x256xf32>
    %cst_68 = arith.constant 0.000000e+00 : f32
    %112 = vector.shape_cast %24 : vector<1x256xi1> to vector<1x256xi1>
    %113 = vector.broadcast %112 : vector<1x256xi1> to vector<8x256xi1>
    %114 = vector.broadcast %cst_68 : f32 to vector<8x256xf32>
    %115 = arith.select %113, %111, %114 : vector<8x256xi1>, vector<8x256xf32>
    %116 = tpu.concatenate %87, %88, %93, %98, %99, %104, %109, %110, %115 in 0 : vector<8x256xf32>, vector<8x256xf32>, vector<8x256xf32>, vector<8x256xf32>, vector<8x256xf32>, vector<8x256xf32>, vector<8x256xf32>, vector<8x256xf32>, vector<8x256xf32> -> vector<72x256xf32>
    %117 = arith.truncf %116 : vector<72x256xf32> to vector<72x256xbf16>
    %c0_69 = arith.constant 0 : index
    %c0_70 = arith.constant 0 : index
    %118 = vector.load %arg5[%c0_69, %c0_70] : memref<8x72xbf16, #tpu.memory_space<vmem>>, vector<8x72xbf16>
    %cst_71 = arith.constant dense<0.000000e+00> : vector<8x256xf32>
    %119 = tpu.matmul %118, %117, %cst_71 {dimension_numbers = #tpu.dot_dimension_numbers<[1], [0], [0], [1], [0, 0, 1, 1], [], []>} : vector<8x72xbf16>, vector<72x256xbf16>, vector<8x256xf32> -> vector<8x256xf32>
    %c0_72 = arith.constant 0 : index
    %c0_73 = arith.constant 0 : index
    %120 = vector.load %arg6[%c0_72, %c0_73] : memref<8x1xf32, #tpu.memory_space<vmem>>, vector<8x1xf32>
    %121 = vector.broadcast %120 : vector<8x1xf32> to vector<8x256xf32>
    %122 = arith.addf %119, %121 : vector<8x256xf32>
    %cst_74 = arith.constant 0.000000e+00 : f32
    %123 = vector.broadcast %cst_74 : f32 to vector<8x256xf32>
    %124 = arith.maximumf %122, %123 : vector<8x256xf32>
    %c0_75 = arith.constant 0 : index
    %c111_76 = arith.constant 111 : index
    %125 = vector.load %arg15[%c0_75, %c111_76] : memref<8x512xf32, #tpu.memory_space<vmem>>, vector<8x256xf32>
    %cst_77 = arith.constant 0.000000e+00 : f32
    %126 = vector.shape_cast %22 : vector<1x256xi1> to vector<1x256xi1>
    %127 = vector.broadcast %126 : vector<1x256xi1> to vector<8x256xi1>
    %128 = vector.broadcast %cst_77 : f32 to vector<8x256xf32>
    %129 = arith.select %127, %125, %128 : vector<8x256xi1>, vector<8x256xf32>
    %c0_78 = arith.constant 0 : index
    %c112_79 = arith.constant 112 : index
    %130 = vector.load %arg15[%c0_78, %c112_79] : memref<8x512xf32, #tpu.memory_space<vmem>>, vector<8x256xf32>
    %c0_80 = arith.constant 0 : index
    %c113_81 = arith.constant 113 : index
    %131 = vector.load %arg15[%c0_80, %c113_81] : memref<8x512xf32, #tpu.memory_space<vmem>>, vector<8x256xf32>
    %cst_82 = arith.constant 0.000000e+00 : f32
    %132 = vector.shape_cast %24 : vector<1x256xi1> to vector<1x256xi1>
    %133 = vector.broadcast %132 : vector<1x256xi1> to vector<8x256xi1>
    %134 = vector.broadcast %cst_82 : f32 to vector<8x256xf32>
    %135 = arith.select %133, %131, %134 : vector<8x256xi1>, vector<8x256xf32>
    %c0_83 = arith.constant 0 : index
    %c127_84 = arith.constant 127 : index
    %136 = vector.load %arg15[%c0_83, %c127_84] : memref<8x512xf32, #tpu.memory_space<vmem>>, vector<8x256xf32>
    %cst_85 = arith.constant 0.000000e+00 : f32
    %137 = vector.shape_cast %22 : vector<1x256xi1> to vector<1x256xi1>
    %138 = vector.broadcast %137 : vector<1x256xi1> to vector<8x256xi1>
    %139 = vector.broadcast %cst_85 : f32 to vector<8x256xf32>
    %140 = arith.select %138, %136, %139 : vector<8x256xi1>, vector<8x256xf32>
    %c0_86 = arith.constant 0 : index
    %c128_87 = arith.constant 128 : index
    %141 = vector.load %arg15[%c0_86, %c128_87] : memref<8x512xf32, #tpu.memory_space<vmem>>, vector<8x256xf32>
    %c0_88 = arith.constant 0 : index
    %c129_89 = arith.constant 129 : index
    %142 = vector.load %arg15[%c0_88, %c129_89] : memref<8x512xf32, #tpu.memory_space<vmem>>, vector<8x256xf32>
    %cst_90 = arith.constant 0.000000e+00 : f32
    %143 = vector.shape_cast %24 : vector<1x256xi1> to vector<1x256xi1>
    %144 = vector.broadcast %143 : vector<1x256xi1> to vector<8x256xi1>
    %145 = vector.broadcast %cst_90 : f32 to vector<8x256xf32>
    %146 = arith.select %144, %142, %145 : vector<8x256xi1>, vector<8x256xf32>
    %c0_91 = arith.constant 0 : index
    %c143_92 = arith.constant 143 : index
    %147 = vector.load %arg15[%c0_91, %c143_92] : memref<8x512xf32, #tpu.memory_space<vmem>>, vector<8x256xf32>
    %cst_93 = arith.constant 0.000000e+00 : f32
    %148 = vector.shape_cast %22 : vector<1x256xi1> to vector<1x256xi1>
    %149 = vector.broadcast %148 : vector<1x256xi1> to vector<8x256xi1>
    %150 = vector.broadcast %cst_93 : f32 to vector<8x256xf32>
    %151 = arith.select %149, %147, %150 : vector<8x256xi1>, vector<8x256xf32>
    %c0_94 = arith.constant 0 : index
    %c144_95 = arith.constant 144 : index
    %152 = vector.load %arg15[%c0_94, %c144_95] : memref<8x512xf32, #tpu.memory_space<vmem>>, vector<8x256xf32>
    %c0_96 = arith.constant 0 : index
    %c145_97 = arith.constant 145 : index
    %153 = vector.load %arg15[%c0_96, %c145_97] : memref<8x512xf32, #tpu.memory_space<vmem>>, vector<8x256xf32>
    %cst_98 = arith.constant 0.000000e+00 : f32
    %154 = vector.shape_cast %24 : vector<1x256xi1> to vector<1x256xi1>
    %155 = vector.broadcast %154 : vector<1x256xi1> to vector<8x256xi1>
    %156 = vector.broadcast %cst_98 : f32 to vector<8x256xf32>
    %157 = arith.select %155, %153, %156 : vector<8x256xi1>, vector<8x256xf32>
    %158 = tpu.concatenate %129, %130, %135, %140, %141, %146, %151, %152, %157 in 0 : vector<8x256xf32>, vector<8x256xf32>, vector<8x256xf32>, vector<8x256xf32>, vector<8x256xf32>, vector<8x256xf32>, vector<8x256xf32>, vector<8x256xf32>, vector<8x256xf32> -> vector<72x256xf32>
    %159 = arith.truncf %158 : vector<72x256xf32> to vector<72x256xbf16>
    %c0_99 = arith.constant 0 : index
    %c0_100 = arith.constant 0 : index
    %160 = vector.load %arg7[%c0_99, %c0_100] : memref<8x72xbf16, #tpu.memory_space<vmem>>, vector<8x72xbf16>
    %cst_101 = arith.constant dense<0.000000e+00> : vector<8x256xf32>
    %161 = tpu.matmul %160, %159, %cst_101 {dimension_numbers = #tpu.dot_dimension_numbers<[1], [0], [0], [1], [0, 0, 1, 1], [], []>} : vector<8x72xbf16>, vector<72x256xbf16>, vector<8x256xf32> -> vector<8x256xf32>
    %c0_102 = arith.constant 0 : index
    %c0_103 = arith.constant 0 : index
    %162 = vector.load %arg8[%c0_102, %c0_103] : memref<8x1xf32, #tpu.memory_space<vmem>>, vector<8x1xf32>
    %163 = vector.broadcast %162 : vector<8x1xf32> to vector<8x256xf32>
    %164 = arith.addf %161, %163 : vector<8x256xf32>
    %cst_104 = arith.constant 0.000000e+00 : f32
    %165 = vector.broadcast %cst_104 : f32 to vector<8x256xf32>
    %166 = arith.maximumf %164, %165 : vector<8x256xf32>
    %c0_105 = arith.constant 0 : index
    %c128_106 = arith.constant 128 : index
    %167 = vector.load %arg14[%c0_105, %c128_106] : memref<8x512xf32, #tpu.memory_space<vmem>>, vector<8x256xf32>
    tpu.vector_store %arg14[%c0_105, %c128_106], %124 {strides = array<i32>} : memref<8x512xf32, #tpu.memory_space<vmem>>, vector<8x256xf32>,
    %c0_107 = arith.constant 0 : index
    %c128_108 = arith.constant 128 : index
    %168 = vector.load %arg15[%c0_107, %c128_108] : memref<8x512xf32, #tpu.memory_space<vmem>>, vector<8x256xf32>
    tpu.vector_store %arg15[%c0_107, %c128_108], %166 {strides = array<i32>} : memref<8x512xf32, #tpu.memory_space<vmem>>, vector<8x256xf32>,
    %c0_109 = arith.constant 0 : index
    %c111_110 = arith.constant 111 : index
    %169 = vector.load %arg14[%c0_109, %c111_110] : memref<8x512xf32, #tpu.memory_space<vmem>>, vector<8x256xf32>
    %cst_111 = arith.constant 0.000000e+00 : f32
    %170 = vector.shape_cast %22 : vector<1x256xi1> to vector<1x256xi1>
    %171 = vector.broadcast %170 : vector<1x256xi1> to vector<8x256xi1>
    %172 = vector.broadcast %cst_111 : f32 to vector<8x256xf32>
    %173 = arith.select %171, %169, %172 : vector<8x256xi1>, vector<8x256xf32>
    %c0_112 = arith.constant 0 : index
    %c111_113 = arith.constant 111 : index
    %174 = vector.load %arg15[%c0_112, %c111_113] : memref<8x512xf32, #tpu.memory_space<vmem>>, vector<8x256xf32>
    %cst_114 = arith.constant 0.000000e+00 : f32
    %175 = vector.shape_cast %22 : vector<1x256xi1> to vector<1x256xi1>
    %176 = vector.broadcast %175 : vector<1x256xi1> to vector<8x256xi1>
    %177 = vector.broadcast %cst_114 : f32 to vector<8x256xf32>
    %178 = arith.select %176, %174, %177 : vector<8x256xi1>, vector<8x256xf32>
    %c0_115 = arith.constant 0 : index
    %c112_116 = arith.constant 112 : index
    %179 = vector.load %arg14[%c0_115, %c112_116] : memref<8x512xf32, #tpu.memory_space<vmem>>, vector<8x256xf32>
    %c0_117 = arith.constant 0 : index
    %c112_118 = arith.constant 112 : index
    %180 = vector.load %arg15[%c0_117, %c112_118] : memref<8x512xf32, #tpu.memory_space<vmem>>, vector<8x256xf32>
    %c0_119 = arith.constant 0 : index
    %c113_120 = arith.constant 113 : index
    %181 = vector.load %arg14[%c0_119, %c113_120] : memref<8x512xf32, #tpu.memory_space<vmem>>, vector<8x256xf32>
    %cst_121 = arith.constant 0.000000e+00 : f32
    %182 = vector.shape_cast %24 : vector<1x256xi1> to vector<1x256xi1>
    %183 = vector.broadcast %182 : vector<1x256xi1> to vector<8x256xi1>
    %184 = vector.broadcast %cst_121 : f32 to vector<8x256xf32>
    %185 = arith.select %183, %181, %184 : vector<8x256xi1>, vector<8x256xf32>
    %c0_122 = arith.constant 0 : index
    %c113_123 = arith.constant 113 : index
    %186 = vector.load %arg15[%c0_122, %c113_123] : memref<8x512xf32, #tpu.memory_space<vmem>>, vector<8x256xf32>
    %cst_124 = arith.constant 0.000000e+00 : f32
    %187 = vector.shape_cast %24 : vector<1x256xi1> to vector<1x256xi1>
    %188 = vector.broadcast %187 : vector<1x256xi1> to vector<8x256xi1>
    %189 = vector.broadcast %cst_124 : f32 to vector<8x256xf32>
    %190 = arith.select %188, %186, %189 : vector<8x256xi1>, vector<8x256xf32>
    %c0_125 = arith.constant 0 : index
    %c127_126 = arith.constant 127 : index
    %191 = vector.load %arg14[%c0_125, %c127_126] : memref<8x512xf32, #tpu.memory_space<vmem>>, vector<8x256xf32>
    %cst_127 = arith.constant 0.000000e+00 : f32
    %192 = vector.shape_cast %22 : vector<1x256xi1> to vector<1x256xi1>
    %193 = vector.broadcast %192 : vector<1x256xi1> to vector<8x256xi1>
    %194 = vector.broadcast %cst_127 : f32 to vector<8x256xf32>
    %195 = arith.select %193, %191, %194 : vector<8x256xi1>, vector<8x256xf32>
    %c0_128 = arith.constant 0 : index
    %c127_129 = arith.constant 127 : index
    %196 = vector.load %arg15[%c0_128, %c127_129] : memref<8x512xf32, #tpu.memory_space<vmem>>, vector<8x256xf32>
    %cst_130 = arith.constant 0.000000e+00 : f32
    %197 = vector.shape_cast %22 : vector<1x256xi1> to vector<1x256xi1>
    %198 = vector.broadcast %197 : vector<1x256xi1> to vector<8x256xi1>
    %199 = vector.broadcast %cst_130 : f32 to vector<8x256xf32>
    %200 = arith.select %198, %196, %199 : vector<8x256xi1>, vector<8x256xf32>
    %c0_131 = arith.constant 0 : index
    %c128_132 = arith.constant 128 : index
    %201 = vector.load %arg14[%c0_131, %c128_132] : memref<8x512xf32, #tpu.memory_space<vmem>>, vector<8x256xf32>
    %c0_133 = arith.constant 0 : index
    %c128_134 = arith.constant 128 : index
    %202 = vector.load %arg15[%c0_133, %c128_134] : memref<8x512xf32, #tpu.memory_space<vmem>>, vector<8x256xf32>
    %c0_135 = arith.constant 0 : index
    %c129_136 = arith.constant 129 : index
    %203 = vector.load %arg14[%c0_135, %c129_136] : memref<8x512xf32, #tpu.memory_space<vmem>>, vector<8x256xf32>
    %cst_137 = arith.constant 0.000000e+00 : f32
    %204 = vector.shape_cast %24 : vector<1x256xi1> to vector<1x256xi1>
    %205 = vector.broadcast %204 : vector<1x256xi1> to vector<8x256xi1>
    %206 = vector.broadcast %cst_137 : f32 to vector<8x256xf32>
    %207 = arith.select %205, %203, %206 : vector<8x256xi1>, vector<8x256xf32>
    %c0_138 = arith.constant 0 : index
    %c129_139 = arith.constant 129 : index
    %208 = vector.load %arg15[%c0_138, %c129_139] : memref<8x512xf32, #tpu.memory_space<vmem>>, vector<8x256xf32>
    %cst_140 = arith.constant 0.000000e+00 : f32
    %209 = vector.shape_cast %24 : vector<1x256xi1> to vector<1x256xi1>
    %210 = vector.broadcast %209 : vector<1x256xi1> to vector<8x256xi1>
    %211 = vector.broadcast %cst_140 : f32 to vector<8x256xf32>
    %212 = arith.select %210, %208, %211 : vector<8x256xi1>, vector<8x256xf32>
    %c0_141 = arith.constant 0 : index
    %c143_142 = arith.constant 143 : index
    %213 = vector.load %arg14[%c0_141, %c143_142] : memref<8x512xf32, #tpu.memory_space<vmem>>, vector<8x256xf32>
    %cst_143 = arith.constant 0.000000e+00 : f32
    %214 = vector.shape_cast %22 : vector<1x256xi1> to vector<1x256xi1>
    %215 = vector.broadcast %214 : vector<1x256xi1> to vector<8x256xi1>
    %216 = vector.broadcast %cst_143 : f32 to vector<8x256xf32>
    %217 = arith.select %215, %213, %216 : vector<8x256xi1>, vector<8x256xf32>
    %c0_144 = arith.constant 0 : index
    %c143_145 = arith.constant 143 : index
    %218 = vector.load %arg15[%c0_144, %c143_145] : memref<8x512xf32, #tpu.memory_space<vmem>>, vector<8x256xf32>
    %cst_146 = arith.constant 0.000000e+00 : f32
    %219 = vector.shape_cast %22 : vector<1x256xi1> to vector<1x256xi1>
    %220 = vector.broadcast %219 : vector<1x256xi1> to vector<8x256xi1>
    %221 = vector.broadcast %cst_146 : f32 to vector<8x256xf32>
    %222 = arith.select %220, %218, %221 : vector<8x256xi1>, vector<8x256xf32>
    %c0_147 = arith.constant 0 : index
    %c144_148 = arith.constant 144 : index
    %223 = vector.load %arg14[%c0_147, %c144_148] : memref<8x512xf32, #tpu.memory_space<vmem>>, vector<8x256xf32>
    %c0_149 = arith.constant 0 : index
    %c144_150 = arith.constant 144 : index
    %224 = vector.load %arg15[%c0_149, %c144_150] : memref<8x512xf32, #tpu.memory_space<vmem>>, vector<8x256xf32>
    %c0_151 = arith.constant 0 : index
    %c145_152 = arith.constant 145 : index
    %225 = vector.load %arg14[%c0_151, %c145_152] : memref<8x512xf32, #tpu.memory_space<vmem>>, vector<8x256xf32>
    %cst_153 = arith.constant 0.000000e+00 : f32
    %226 = vector.shape_cast %24 : vector<1x256xi1> to vector<1x256xi1>
    %227 = vector.broadcast %226 : vector<1x256xi1> to vector<8x256xi1>
    %228 = vector.broadcast %cst_153 : f32 to vector<8x256xf32>
    %229 = arith.select %227, %225, %228 : vector<8x256xi1>, vector<8x256xf32>
    %c0_154 = arith.constant 0 : index
    %c145_155 = arith.constant 145 : index
    %230 = vector.load %arg15[%c0_154, %c145_155] : memref<8x512xf32, #tpu.memory_space<vmem>>, vector<8x256xf32>
    %cst_156 = arith.constant 0.000000e+00 : f32
    %231 = vector.shape_cast %24 : vector<1x256xi1> to vector<1x256xi1>
    %232 = vector.broadcast %231 : vector<1x256xi1> to vector<8x256xi1>
    %233 = vector.broadcast %cst_156 : f32 to vector<8x256xf32>
    %234 = arith.select %232, %230, %233 : vector<8x256xi1>, vector<8x256xf32>
    %235 = tpu.concatenate %173, %178, %179, %180, %185, %190, %195, %200, %201, %202, %207, %212, %217, %222, %223, %224 in 0 : vector<8x256xf32>, vector<8x256xf32>, vector<8x256xf32>, vector<8x256xf32>, vector<8x256xf32>, vector<8x256xf32>, vector<8x256xf32>, vector<8x256xf32>, vector<8x256xf32>, vector<8x256xf32>, vector<8x256xf32>, vector<8x256xf32>, vector<8x256xf32>, vector<8x256xf32>, vector<8x256xf32>, vector<8x256xf32> -> vector<128x256xf32>
    %236 = tpu.concatenate %229, %234 in 0 : vector<8x256xf32>, vector<8x256xf32> -> vector<16x256xf32>
    %237 = tpu.concatenate %235, %236 in 0 : vector<128x256xf32>, vector<16x256xf32> -> vector<144x256xf32>
    %238 = arith.truncf %237 : vector<144x256xf32> to vector<144x256xbf16>
    %c0_157 = arith.constant 0 : index
    %c0_158 = arith.constant 0 : index
    %239 = vector.load %arg9[%c0_157, %c0_158] : memref<8x144xbf16, #tpu.memory_space<vmem>>, vector<8x144xbf16>
    %cst_159 = arith.constant dense<0.000000e+00> : vector<8x256xf32>
    %240 = tpu.matmul %239, %238, %cst_159 {dimension_numbers = #tpu.dot_dimension_numbers<[1], [0], [0], [1], [0, 0, 1, 1], [], []>} : vector<8x144xbf16>, vector<144x256xbf16>, vector<8x256xf32> -> vector<8x256xf32>
    %c0_160 = arith.constant 0 : index
    %c0_161 = arith.constant 0 : index
    %241 = vector.load %arg10[%c0_160, %c0_161] : memref<8x1xf32, #tpu.memory_space<vmem>>, vector<8x1xf32>
    %242 = vector.broadcast %241 : vector<8x1xf32> to vector<8x256xf32>
    %243 = arith.addf %240, %242 : vector<8x256xf32>
    %cst_162 = arith.constant 0.000000e+00 : f32
    %244 = vector.broadcast %cst_162 : f32 to vector<8x256xf32>
    %245 = arith.maximumf %243, %244 : vector<8x256xf32>
    %246 = arith.addf %245, %74 : vector<8x256xf32>
    %247 = arith.truncf %246 : vector<8x256xf32> to vector<8x256xbf16>
    %c0_163 = arith.constant 0 : index
    %c0_164 = arith.constant 0 : index
    %248 = vector.load %arg11[%c0_163, %c0_164] : memref<4x8xbf16, #tpu.memory_space<vmem>>, vector<4x8xbf16>
    %cst_165 = arith.constant dense<0.000000e+00> : vector<4x256xf32>
    %249 = tpu.matmul %248, %247, %cst_165 {dimension_numbers = #tpu.dot_dimension_numbers<[1], [0], [0], [1], [0, 0, 1, 1], [], []>} : vector<4x8xbf16>, vector<8x256xbf16>, vector<4x256xf32> -> vector<4x256xf32>
    %c0_166 = arith.constant 0 : index
    %c0_167 = arith.constant 0 : index
    %250 = vector.load %arg12[%c0_166, %c0_167] : memref<4x1xf32, #tpu.memory_space<vmem>>, vector<4x1xf32>
    %251 = vector.broadcast %250 : vector<4x1xf32> to vector<4x256xf32>
    %252 = arith.addf %249, %251 : vector<4x256xf32>
    %cst_168 = arith.constant 0.000000e+00 : f32
    %253 = vector.broadcast %cst_168 : f32 to vector<4x256xf32>
    %254 = arith.maximumf %252, %253 : vector<4x256xf32>
    %c0_169 = arith.constant 0 : index
    %c0_170 = arith.constant 0 : index
    %c0_171 = arith.constant 0 : index
    %255 = vector.load %arg13[%c0_169, %c0_170, %c0_171] : memref<1x4x256xf32, #tpu.memory_space<vmem>>, vector<1x4x256xf32>
    %256 = vector.shape_cast %255 : vector<1x4x256xf32> to vector<4x256xf32>
    %257 = vector.shape_cast %254 : vector<4x256xf32> to vector<1x4x256xf32>
    tpu.vector_store %arg13[%c0_169, %c0_170, %c0_171], %257 {strides = array<i32>} : memref<1x4x256xf32, #tpu.memory_space<vmem>>, vector<1x4x256xf32>,
    return
  }
  func.func @transform_0(%arg0: i32) -> (i32, i32, i32) {
    %c0_i32 = arith.constant 0 : i32
    %c0_i32_0 = arith.constant 0 : i32
    %c0_i32_1 = arith.constant 0 : i32
    return %arg0, %c0_i32, %c0_i32_0 : i32, i32, i32
  }
  func.func @transform_1(%arg0: i32) -> (i32, i32, i32) {
    %c0_i32 = arith.constant 0 : i32
    %c0_i32_0 = arith.constant 0 : i32
    %c0_i32_1 = arith.constant 0 : i32
    return %arg0, %c0_i32, %c0_i32_0 : i32, i32, i32
  }
  func.func @transform_2(%arg0: i32) -> (i32, i32) {
    %c0_i32 = arith.constant 0 : i32
    %c0_i32_0 = arith.constant 0 : i32
    %c0_i32_1 = arith.constant 0 : i32
    return %c0_i32, %c0_i32_0 : i32, i32
  }
  func.func @transform_3(%arg0: i32) -> (i32, i32) {
    %c0_i32 = arith.constant 0 : i32
    %c0_i32_0 = arith.constant 0 : i32
    %c0_i32_1 = arith.constant 0 : i32
    return %c0_i32, %c0_i32_0 : i32, i32
  }
  func.func @transform_4(%arg0: i32) -> (i32, i32) {
    %c0_i32 = arith.constant 0 : i32
    %c0_i32_0 = arith.constant 0 : i32
    %c0_i32_1 = arith.constant 0 : i32
    return %c0_i32, %c0_i32_0 : i32, i32
  }
  func.func @transform_5(%arg0: i32) -> (i32, i32) {
    %c0_i32 = arith.constant 0 : i32
    %c0_i32_0 = arith.constant 0 : i32
    %c0_i32_1 = arith.constant 0 : i32
    return %c0_i32, %c0_i32_0 : i32, i32
  }
  func.func @transform_6(%arg0: i32) -> (i32, i32) {
    %c0_i32 = arith.constant 0 : i32
    %c0_i32_0 = arith.constant 0 : i32
    %c0_i32_1 = arith.constant 0 : i32
    return %c0_i32, %c0_i32_0 : i32, i32
  }
  func.func @transform_7(%arg0: i32) -> (i32, i32) {
    %c0_i32 = arith.constant 0 : i32
    %c0_i32_0 = arith.constant 0 : i32
    %c0_i32_1 = arith.constant 0 : i32
    return %c0_i32, %c0_i32_0 : i32, i32
  }
  func.func @transform_8(%arg0: i32) -> (i32, i32) {
    %c0_i32 = arith.constant 0 : i32
    %c0_i32_0 = arith.constant 0 : i32
    %c0_i32_1 = arith.constant 0 : i32
    return %c0_i32, %c0_i32_0 : i32, i32
  }
  func.func @transform_9(%arg0: i32) -> (i32, i32) {
    %c0_i32 = arith.constant 0 : i32
    %c0_i32_0 = arith.constant 0 : i32
    %c0_i32_1 = arith.constant 0 : i32
    return %c0_i32, %c0_i32_0 : i32, i32
  }
  func.func @transform_10(%arg0: i32) -> (i32, i32) {
    %c0_i32 = arith.constant 0 : i32
    %c0_i32_0 = arith.constant 0 : i32
    %c0_i32_1 = arith.constant 0 : i32
    return %c0_i32, %c0_i32_0 : i32, i32
  }
  func.func @transform_11(%arg0: i32) -> (i32, i32) {
    %c0_i32 = arith.constant 0 : i32
    %c0_i32_0 = arith.constant 0 : i32
    %c0_i32_1 = arith.constant 0 : i32
    return %c0_i32, %c0_i32_0 : i32, i32
  }
  func.func @transform_12(%arg0: i32) -> (i32, i32, i32) {
    %c0_i32 = arith.constant 0 : i32
    %c0_i32_0 = arith.constant 0 : i32
    %c0_i32_1 = arith.constant 0 : i32
    return %arg0, %c0_i32, %c0_i32_0 : i32, i32, i32
  }
}

</mosaic_0001>

<llo_original>
// kernel: tfim_forward.1
$region0: #{tfim_forward.1}
  #allocation0 [shape = 'u32[]', space=smem, size = 0x4, offset = 0x4, fixed_abs, tag = 'smem constant byte address 0x4 - core index']
  #allocation1 [shape = 'u32[72,128]{1,0:T(1,128)}', space=vmem, size = 0x9000, scoped, tag = 'internal scratch']
  #allocation2 [shape = 'f32[8,512]{1,0:T(8,128)}', space=vmem, size = 0x4000, scoped, tag = 'scratch operand']
  #allocation3 [shape = 'f32[8,512]{1,0:T(8,128)}', space=vmem, size = 0x4000, scoped, tag = 'scratch operand']
  %s0 = inlined_call_operand.vmem [shape: f32[2,8,256], index: 0, kind: input, shape index: {}]
  %s1 = inlined_call_operand.vmem [shape: f32[2,8,256], index: 1, kind: input, shape index: {}]
  %s2 = inlined_call_operand.vmem [shape: bf16[8,72], index: 2, kind: input, shape index: {}]
  %s3 = inlined_call_operand.vmem [shape: f32[8,1], index: 3, kind: input, shape index: {}]
  %s4 = inlined_call_operand.vmem [shape: bf16[8,72], index: 4, kind: input, shape index: {}]
  %s5 = inlined_call_operand.vmem [shape: f32[8,1], index: 5, kind: input, shape index: {}]
  %s6 = inlined_call_operand.vmem [shape: bf16[8,72], index: 6, kind: input, shape index: {}]
  %s7 = inlined_call_operand.vmem [shape: f32[8,1], index: 7, kind: input, shape index: {}]
  %s8 = inlined_call_operand.vmem [shape: bf16[8,144], index: 8, kind: input, shape index: {}]
  %s9 = inlined_call_operand.vmem [shape: f32[8,1], index: 9, kind: input, shape index: {}]
  %s10 = inlined_call_operand.vmem [shape: bf16[4,8], index: 10, kind: input, shape index: {}]
  %s11 = inlined_call_operand.vmem [shape: f32[4,1], index: 11, kind: input, shape index: {}]
  %s12 = inlined_call_operand.vmem [shape: f32[2,4,256], index: 12, kind: output, shape index: {}]
  %s13 = sld [smem:[#allocation0]]
  $region81: #{tfim_forward.1} parent=0
    _
  %s15 = ssub.s32 1, %s13
  %s16 = scalar_select 0, %s15, %s13
  loop: start=0, step=1, limit=4
  $region2: #{tfim_forward.1} parent=0 // loop_pre_header
    _
  $region3: #{tfim_forward.1} parent=0 // loop_header
    %s18 = sphi 0, %s22
    %p19 = scmp.ge.s32.totalorder %s18, 4
    %s28 = sphi 0, %s30
    %s31 = sphi 0, %s28
    %s32 = sphi 0, %s31
    %s48 = sphi 0, %s32
    %s54 = sphi 0, %s56
    %s57 = sphi 0, %s54
    %s58 = sphi 0, %s57
    %s74 = sphi 0, %s58
    %s78 = sphi 0, %s78
    %s80 = sphi 0, %s78
    %s81 = sphi 0, %s80
    %s95 = sphi 0, %s81
    %s99 = sphi 0, %s99
    %s101 = sphi 0, %s99
    %s102 = sphi 0, %s101
    %s116 = sphi 0, %s102
    %s120 = sphi 0, %s120
    %s122 = sphi 0, %s120
    %s123 = sphi 0, %s122
    %s137 = sphi 0, %s123
    %s141 = sphi 0, %s141
    %s143 = sphi 0, %s141
    %s144 = sphi 0, %s143
    %s158 = sphi 0, %s144
    %s162 = sphi 0, %s162
    %s164 = sphi 0, %s162
    %s165 = sphi 0, %s164
    %s179 = sphi 0, %s165
    %s183 = sphi 0, %s183
    %s185 = sphi 0, %s183
    %s186 = sphi 0, %s185
    %s200 = sphi 0, %s186
    %s204 = sphi 0, %s204
    %s206 = sphi 0, %s204
    %s207 = sphi 0, %s206
    %s221 = sphi 0, %s207
    %s225 = sphi 0, %s225
    %s227 = sphi 0, %s225
    %s228 = sphi 0, %s227
    %s242 = sphi 0, %s228
    %s246 = sphi 0, %s246
    %s248 = sphi 0, %s246
    %s249 = sphi 0, %s248
    %s263 = sphi 0, %s249
    %s267 = sphi 0, %s267
    %s269 = sphi 0, %s267
    %s270 = sphi 0, %s269
    %s284 = sphi 0, %s270
    %s290 = sphi 0, %s292
    %s293 = sphi 0, %s290
    %s294 = sphi 0, %s293
    %s310 = sphi 0, %s294
  $region4: #{tfim_forward.1} parent=0 // loop_header_branch
    %21 = sbr.rel (%p19) target = $region8
  $region5: #{tfim_forward.1} parent=0 // loop_body
    %s23 = ssub.s32 %s18, 1
    %s24 = ssub.s32 %s18, 2
    %s25 = sadd.s32 %s18, 1
    %s26 = ssub.s32 %s18, %s25
    %p27 = scmp.eq.s32.totalorder %s26, 0
    %s29 = sadd.s32 %s28, 1
    %s30 = scalar_select %p27, %s28, %s29
    %p33 = pneg %p27
    %p34 = scmp.eq.s32.totalorder %s18, 1
    %p35 = por %p33, %p34
    %p36 = scmp.ne.s32.totalorder %s28, %s31
    %p37 = scmp.eq.s32.totalorder %s18, 0
    %p38 = por %p36, %p37
    %p39 = scmp.ne.s32.totalorder %s28, %s31
    %p40 = scmp.eq.s32.totalorder %s23, 1
    %p41 = por %p39, %p40
    %p42 = scmp.ne.s32.totalorder %s31, %s32
    %p43 = scmp.eq.s32.totalorder %s23, 0
    %p44 = por %p42, %p43
    %p45 = scmp.ne.s32.totalorder %s31, %s32
    %p46 = scmp.eq.s32.totalorder %s24, 1
    %p47 = por %p45, %p46
    %p49 = scmp.ne.s32.totalorder %s32, %s48
    %p50 = scmp.eq.s32.totalorder %s24, 0
    %p51 = por %p49, %p50
    %s52 = ssub.s32 %s18, %s25
    %p53 = scmp.eq.s32.totalorder %s52, 0
    %s55 = sadd.s32 %s54, 1
    %s56 = scalar_select %p53, %s54, %s55
    %p59 = pneg %p53
    %p60 = scmp.eq.s32.totalorder %s18, 1
    %p61 = por %p59, %p60
    %p62 = scmp.ne.s32.totalorder %s54, %s57
    %p63 = scmp.eq.s32.totalorder %s18, 0
    %p64 = por %p62, %p63
    %p65 = scmp.ne.s32.totalorder %s54, %s57
    %p66 = scmp.eq.s32.totalorder %s23, 1
    %p67 = por %p65, %p66
    %p68 = scmp.ne.s32.totalorder %s57, %s58
    %p69 = scmp.eq.s32.totalorder %s23, 0
    %p70 = por %p68, %p69
    %p71 = scmp.ne.s32.totalorder %s57, %s58
    %p72 = scmp.eq.s32.totalorder %s24, 1
    %p73 = por %p71, %p72
    %p75 = scmp.ne.s32.totalorder %s58, %s74
    %p76 = scmp.eq.s32.totalorder %s24, 0
    %p77 = por %p75, %p76
    %s79 = sadd.s32 %s78, 1
    %p82 = scmp.eq.s32.totalorder %s18, 1
    %p83 = scmp.ne.s32.totalorder %s78, %s80
    %p84 = scmp.eq.s32.totalorder %s18, 0
    %p85 = por %p83, %p84
    %p86 = scmp.ne.s32.totalorder %s78, %s80
    %p87 = scmp.eq.s32.totalorder %s23, 1
    %p88 = por %p86, %p87
    %p89 = scmp.ne.s32.totalorder %s80, %s81
    %p90 = scmp.eq.s32.totalorder %s23, 0
    %p91 = por %p89, %p90
    %p92 = scmp.ne.s32.totalorder %s80, %s81
    %p93 = scmp.eq.s32.totalorder %s24, 1
    %p94 = por %p92, %p93
    %p96 = scmp.ne.s32.totalorder %s81, %s95
    %p97 = scmp.eq.s32.totalorder %s24, 0
    %p98 = por %p96, %p97
    %s100 = sadd.s32 %s99, 1
    %p103 = scmp.eq.s32.totalorder %s18, 1
    %p104 = scmp.ne.s32.totalorder %s99, %s101
    %p105 = scmp.eq.s32.totalorder %s18, 0
    %p106 = por %p104, %p105
    %p107 = scmp.ne.s32.totalorder %s99, %s101
    %p108 = scmp.eq.s32.totalorder %s23, 1
    %p109 = por %p107, %p108
    %p110 = scmp.ne.s32.totalorder %s101, %s102
    %p111 = scmp.eq.s32.totalorder %s23, 0
    %p112 = por %p110, %p111
    %p113 = scmp.ne.s32.totalorder %s101, %s102
    %p114 = scmp.eq.s32.totalorder %s24, 1
    %p115 = por %p113, %p114
    %p117 = scmp.ne.s32.totalorder %s102, %s116
    %p118 = scmp.eq.s32.totalorder %s24, 0
    %p119 = por %p117, %p118
    %s121 = sadd.s32 %s120, 1
    %p124 = scmp.eq.s32.totalorder %s18, 1
    %p125 = scmp.ne.s32.totalorder %s120, %s122
    %p126 = scmp.eq.s32.totalorder %s18, 0
    %p127 = por %p125, %p126
    %p128 = scmp.ne.s32.totalorder %s120, %s122
    %p129 = scmp.eq.s32.totalorder %s23, 1
    %p130 = por %p128, %p129
    %p131 = scmp.ne.s32.totalorder %s122, %s123
    %p132 = scmp.eq.s32.totalorder %s23, 0
    %p133 = por %p131, %p132
    %p134 = scmp.ne.s32.totalorder %s122, %s123
    %p135 = scmp.eq.s32.totalorder %s24, 1
    %p136 = por %p134, %p135
    %p138 = scmp.ne.s32.totalorder %s123, %s137
    %p139 = scmp.eq.s32.totalorder %s24, 0
    %p140 = por %p138, %p139
    %s142 = sadd.s32 %s141, 1
    %p145 = scmp.eq.s32.totalorder %s18, 1
    %p146 = scmp.ne.s32.totalorder %s141, %s143
    %p147 = scmp.eq.s32.totalorder %s18, 0
    %p148 = por %p146, %p147
    %p149 = scmp.ne.s32.totalorder %s141, %s143
    %p150 = scmp.eq.s32.totalorder %s23, 1
    %p151 = por %p149, %p150
    %p152 = scmp.ne.s32.totalorder %s143, %s144
    %p153 = scmp.eq.s32.totalorder %s23, 0
    %p154 = por %p152, %p153
    %p155 = scmp.ne.s32.totalorder %s143, %s144
    %p156 = scmp.eq.s32.totalorder %s24, 1
    %p157 = por %p155, %p156
    %p159 = scmp.ne.s32.totalorder %s144, %s158
    %p160 = scmp.eq.s32.totalorder %s24, 0
    %p161 = por %p159, %p160
    %s163 = sadd.s32 %s162, 1
    %p166 = scmp.eq.s32.totalorder %s18, 1
    %p167 = scmp.ne.s32.totalorder %s162, %s164
    %p168 = scmp.eq.s32.totalorder %s18, 0
    %p169 = por %p167, %p168
    %p170 = scmp.ne.s32.totalorder %s162, %s164
    %p171 = scmp.eq.s32.totalorder %s23, 1
    %p172 = por %p170, %p171
    %p173 = scmp.ne.s32.totalorder %s164, %s165
    %p174 = scmp.eq.s32.totalorder %s23, 0
    %p175 = por %p173, %p174
    %p176 = scmp.ne.s32.totalorder %s164, %s165
    %p177 = scmp.eq.s32.totalorder %s24, 1
    %p178 = por %p176, %p177
    %p180 = scmp.ne.s32.totalorder %s165, %s179
    %p181 = scmp.eq.s32.totalorder %s24, 0
    %p182 = por %p180, %p181
    %s184 = sadd.s32 %s183, 1
    %p187 = scmp.eq.s32.totalorder %s18, 1
    %p188 = scmp.ne.s32.totalorder %s183, %s185
    %p189 = scmp.eq.s32.totalorder %s18, 0
    %p190 = por %p188, %p189
    %p191 = scmp.ne.s32.totalorder %s183, %s185
    %p192 = scmp.eq.s32.totalorder %s23, 1
    %p193 = por %p191, %p192
    %p194 = scmp.ne.s32.totalorder %s185, %s186
    %p195 = scmp.eq.s32.totalorder %s23, 0
    %p196 = por %p194, %p195
    %p197 = scmp.ne.s32.totalorder %s185, %s186
    %p198 = scmp.eq.s32.totalorder %s24, 1
    %p199 = por %p197, %p198
    %p201 = scmp.ne.s32.totalorder %s186, %s200
    %p202 = scmp.eq.s32.totalorder %s24, 0
    %p203 = por %p201, %p202
    %s205 = sadd.s32 %s204, 1
    %p208 = scmp.eq.s32.totalorder %s18, 1
    %p209 = scmp.ne.s32.totalorder %s204, %s206
    %p210 = scmp.eq.s32.totalorder %s18, 0
    %p211 = por %p209, %p210
    %p212 = scmp.ne.s32.totalorder %s204, %s206
    %p213 = scmp.eq.s32.totalorder %s23, 1
    %p214 = por %p212, %p213
    %p215 = scmp.ne.s32.totalorder %s206, %s207
    %p216 = scmp.eq.s32.totalorder %s23, 0
    %p217 = por %p215, %p216
    %p218 = scmp.ne.s32.totalorder %s206, %s207
    %p219 = scmp.eq.s32.totalorder %s24, 1
    %p220 = por %p218, %p219
    %p222 = scmp.ne.s32.totalorder %s207, %s221
    %p223 = scmp.eq.s32.totalorder %s24, 0
    %p224 = por %p222, %p223
    %s226 = sadd.s32 %s225, 1
    %p229 = scmp.eq.s32.totalorder %s18, 1
    %p230 = scmp.ne.s32.totalorder %s225, %s227
    %p231 = scmp.eq.s32.totalorder %s18, 0
    %p232 = por %p230, %p231
    %p233 = scmp.ne.s32.totalorder %s225, %s227
    %p234 = scmp.eq.s32.totalorder %s23, 1
    %p235 = por %p233, %p234
    %p236 = scmp.ne.s32.totalorder %s227, %s228
    %p237 = scmp.eq.s32.totalorder %s23, 0
    %p238 = por %p236, %p237
    %p239 = scmp.ne.s32.totalorder %s227, %s228
    %p240 = scmp.eq.s32.totalorder %s24, 1
    %p241 = por %p239, %p240
    %p243 = scmp.ne.s32.totalorder %s228, %s242
    %p244 = scmp.eq.s32.totalorder %s24, 0
    %p245 = por %p243, %p244
    %s247 = sadd.s32 %s246, 1
    %p250 = scmp.eq.s32.totalorder %s18, 1
    %p251 = scmp.ne.s32.totalorder %s246, %s248
    %p252 = scmp.eq.s32.totalorder %s18, 0
    %p253 = por %p251, %p252
    %p254 = scmp.ne.s32.totalorder %s246, %s248
    %p255 = scmp.eq.s32.totalorder %s23, 1
    %p256 = por %p254, %p255
    %p257 = scmp.ne.s32.totalorder %s248, %s249
    %p258 = scmp.eq.s32.totalorder %s23, 0
    %p259 = por %p257, %p258
    %p260 = scmp.ne.s32.totalorder %s248, %s249
    %p261 = scmp.eq.s32.totalorder %s24, 1
    %p262 = por %p260, %p261
    %p264 = scmp.ne.s32.totalorder %s249, %s263
    %p265 = scmp.eq.s32.totalorder %s24, 0
    %p266 = por %p264, %p265
    %s268 = sadd.s32 %s267, 1
    %p271 = scmp.eq.s32.totalorder %s18, 1
    %p272 = scmp.ne.s32.totalorder %s267, %s269
    %p273 = scmp.eq.s32.totalorder %s18, 0
    %p274 = por %p272, %p273
    %p275 = scmp.ne.s32.totalorder %s267, %s269
    %p276 = scmp.eq.s32.totalorder %s23, 1
    %p277 = por %p275, %p276
    %p278 = scmp.ne.s32.totalorder %s269, %s270
    %p279 = scmp.eq.s32.totalorder %s23, 0
    %p280 = por %p278, %p279
    %p281 = scmp.ne.s32.totalorder %s269, %s270
    %p282 = scmp.eq.s32.totalorder %s24, 1
    %p283 = por %p281, %p282
    %p285 = scmp.ne.s32.totalorder %s270, %s284
    %p286 = scmp.eq.s32.totalorder %s24, 0
    %p287 = por %p285, %p286
    %s288 = ssub.s32 %s18, %s25
    %p289 = scmp.eq.s32.totalorder %s288, 0
    %s291 = sadd.s32 %s290, 1
    %s292 = scalar_select %p289, %s290, %s291
    %p295 = pneg %p289
    %p296 = scmp.eq.s32.totalorder %s18, 1
    %p297 = por %p295, %p296
    %p298 = scmp.ne.s32.totalorder %s290, %s293
    %p299 = scmp.eq.s32.totalorder %s18, 0
    %p300 = por %p298, %p299
    %p301 = scmp.ne.s32.totalorder %s290, %s293
    %p302 = scmp.eq.s32.totalorder %s23, 1
    %p303 = por %p301, %p302
    %p304 = scmp.ne.s32.totalorder %s293, %s294
    %p305 = scmp.eq.s32.totalorder %s23, 0
    %p306 = por %p304, %p305
    %p307 = scmp.ne.s32.totalorder %s293, %s294
    %p308 = scmp.eq.s32.totalorder %s24, 1
    %p309 = por %p307, %p308
    %p311 = scmp.ne.s32.totalorder %s294, %s310
    %p312 = scmp.eq.s32.totalorder %s24, 0
    %p313 = por %p311, %p312
    %p314 = scmp.le.s32.totalorder 1, %s18
    %p315 = scmp.lt.s32.totalorder %s18, 3
    %p316 = pnand %p314, %p315
    %p317 = pneg %p316
    // Predicated region
    $region9: #{tfim_forward.1} parent=5 // pred_check
      _
    $region10: #{tfim_forward.1} parent=5 // pred_check_branch
      %319 = sbr.rel (%p316) target = $region12
    $region11: #{tfim_forward.1} parent=5 // pred_region
      %s320 = ssub.s32 %s18, 1
      // Predicated region
      $region13: #{tfim_forward.1} parent=11 // pred_check
        %p321 = pneg %p91
      $region14: #{tfim_forward.1} parent=11 // pred_check_branch
        %323 = sbr.rel (%p321) target = $region16
      $region15: #{tfim_forward.1} parent=11 // pred_region
        _
      $region16: #{tfim_forward.1} parent=11 // pred_fallthru
        _
      // Predicated region
      $region17: #{tfim_forward.1} parent=11 // pred_check
        %p324 = pneg %p112
      $region18: #{tfim_forward.1} parent=11 // pred_check_branch
        %326 = sbr.rel (%p324) target = $region20
      $region19: #{tfim_forward.1} parent=11 // pred_region
        _
      $region20: #{tfim_forward.1} parent=11 // pred_fallthru
        _
      // Predicated region
      $region21: #{tfim_forward.1} parent=11 // pred_check
        %p327 = pneg %p133
      $region22: #{tfim_forward.1} parent=11 // pred_check_branch
        %329 = sbr.rel (%p327) target = $region24
      $region23: #{tfim_forward.1} parent=11 // pred_region
        _
      $region24: #{tfim_forward.1} parent=11 // pred_fallthru
        _
      // Predicated region
      $region25: #{tfim_forward.1} parent=11 // pred_check
        %p330 = pneg %p154
      $region26: #{tfim_forward.1} parent=11 // pred_check_branch
        %332 = sbr.rel (%p330) target = $region28
      $region27: #{tfim_forward.1} parent=11 // pred_region
        _
      $region28: #{tfim_forward.1} parent=11 // pred_fallthru
        _
      // Predicated region
      $region29: #{tfim_forward.1} parent=11 // pred_check
        %p333 = pneg %p175
      $region30: #{tfim_forward.1} parent=11 // pred_check_branch
        %335 = sbr.rel (%p333) target = $region32
      $region31: #{tfim_forward.1} parent=11 // pred_region
        _
      $region32: #{tfim_forward.1} parent=11 // pred_fallthru
        _
      // Predicated region
      $region33: #{tfim_forward.1} parent=11 // pred_check
        %p336 = pneg %p196
      $region34: #{tfim_forward.1} parent=11 // pred_check_branch
        %338 = sbr.rel (%p336) target = $region36
      $region35: #{tfim_forward.1} parent=11 // pred_region
        _
      $region36: #{tfim_forward.1} parent=11 // pred_fallthru
        _
      // Predicated region
      $region37: #{tfim_forward.1} parent=11 // pred_check
        %p339 = pneg %p217
      $region38: #{tfim_forward.1} parent=11 // pred_check_branch
        %341 = sbr.rel (%p339) target = $region40
      $region39: #{tfim_forward.1} parent=11 // pred_region
        _
      $region40: #{tfim_forward.1} parent=11 // pred_fallthru
        _
      // Predicated region
      $region41: #{tfim_forward.1} parent=11 // pred_check
        %p342 = pneg %p238
      $region42: #{tfim_forward.1} parent=11 // pred_check_branch
        %344 = sbr.rel (%p342) target = $region44
      $region43: #{tfim_forward.1} parent=11 // pred_region
        _
      $region44: #{tfim_forward.1} parent=11 // pred_fallthru
        _
      // Predicated region
      $region45: #{tfim_forward.1} parent=11 // pred_check
        %p345 = pneg %p259
      $region46: #{tfim_forward.1} parent=11 // pred_check_branch
        %347 = sbr.rel (%p345) target = $region48
      $region47: #{tfim_forward.1} parent=11 // pred_region
        _
      $region48: #{tfim_forward.1} parent=11 // pred_fallthru
        _
      // Predicated region
      $region49: #{tfim_forward.1} parent=11 // pred_check
        %p348 = pneg %p280
      $region50: #{tfim_forward.1} parent=11 // pred_check_branch
        %350 = sbr.rel (%p348) target = $region52
      $region51: #{tfim_forward.1} parent=11 // pred_region
        _
      $region52: #{tfim_forward.1} parent=11 // pred_fallthru
        _
    $region12: #{tfim_forward.1} parent=5 // pred_fallthru
      _
    %p351 = scmp.lt.s32.totalorder %s18, 2
    // Predicated region
    $region53: #{tfim_forward.1} parent=5 // pred_check
      %p352 = pneg %p351
    $region54: #{tfim_forward.1} parent=5 // pred_check_branch
      %354 = sbr.rel (%p352) target = $region56
    $region55: #{tfim_forward.1} parent=5 // pred_region
      // Predicated region
      $region57: #{tfim_forward.1} parent=55 // pred_check
        %p355 = pneg %p38
      $region58: #{tfim_forward.1} parent=55 // pred_check_branch
        %357 = sbr.rel (%p355) target = $region60
      $region59: #{tfim_forward.1} parent=55 // pred_region
        %p358 = scmp.lt.s32.totalorder %s18, 1
        %s359 = scalar_select %p358, %s18, 1
        %s360 = smul.addr %s359, 2
        %s361 = smul.addr %s360, 8
        %s362 = scalar_lea.vmem %s0, %s361
      $region60: #{tfim_forward.1} parent=55 // pred_fallthru
        _
      // Predicated region
      $region61: #{tfim_forward.1} parent=55 // pred_check
        %p363 = pneg %p64
      $region62: #{tfim_forward.1} parent=55 // pred_check_branch
        %365 = sbr.rel (%p363) target = $region64
      $region63: #{tfim_forward.1} parent=55 // pred_region
        %p366 = scmp.lt.s32.totalorder %s18, 1
        %s367 = scalar_select %p366, %s18, 1
        %s368 = smul.addr %s367, 2
        %s369 = smul.addr %s368, 8
        %s370 = scalar_lea.vmem %s1, %s369
      $region64: #{tfim_forward.1} parent=55 // pred_fallthru
        _
    $region56: #{tfim_forward.1} parent=5 // pred_fallthru
      _
    %p371 = scmp.le.s32.totalorder 1, %s18
    %p372 = scmp.lt.s32.totalorder %s18, 3
    %p373 = pnand %p371, %p372
    %p374 = pneg %p373
    // Predicated region
    $region65: #{tfim_forward.1} parent=5 // pred_check
      _
    $region66: #{tfim_forward.1} parent=5 // pred_check_branch
      %376 = sbr.rel (%p373) target = $region68
    $region67: #{tfim_forward.1} parent=5 // pred_region
      %s377 = ssub.s32 %s18, 1
      %p378 = scmp.lt.s32.totalorder %s23, 1
      %s379 = scalar_select %p378, %s23, 1
      %s380 = smul.addr %s379, 2
      %s381 = smul.addr %s380, 8
      %s382 = scalar_lea.vmem %s0, %s381
      %p383 = pneg %p44
      %p384 = pneg %p41
      %p385 = scmp.lt.s32.totalorder %s23, 1
      %s386 = scalar_select %p385, %s23, 1
      %s387 = smul.addr %s386, 2
      %s388 = smul.addr %s387, 8
      %s389 = scalar_lea.vmem %s1, %s388
      %p390 = pneg %p70
      %p391 = pneg %p67
      %p392 = pneg %p91
      %p393 = pneg %p88
      %p394 = pneg %p112
      %p395 = pneg %p109
      %p396 = pneg %p133
      %p397 = pneg %p130
      %p398 = pneg %p154
      %p399 = pneg %p151
      %p400 = pneg %p175
      %p401 = pneg %p172
      %p402 = pneg %p196
      %p403 = pneg %p193
      %p404 = pneg %p217
      %p405 = pneg %p214
      %p406 = pneg %p238
      %p407 = pneg %p235
      %p408 = pneg %p259
      %p409 = pneg %p256
      %p410 = pneg %p280
      %p411 = pneg %p277
      %p412 = pneg %p306
      %p413 = pneg %p303
      %p414 = scmp.lt.s32.totalorder %s23, 1
      %s415 = scalar_select %p414, %s23, 1
      %s416 = smul.addr %s415, 2
      %s417 = smul.addr %s416, 4
      %s418 = scalar_lea.vmem %s12, %s417
      %p419 = scmp.lt.s32.totalorder %s23, 1
      %s420 = scalar_select %p419, %s23, 1
      %s421 = smul.addr %s420, 2
      %s422 = smul.addr %s421, 8
      %s423 = scalar_lea.vmem %s0, %s422
      %p424 = scmp.lt.s32.totalorder %s23, 1
      %s425 = scalar_select %p424, %s23, 1
      %s426 = smul.addr %s425, 2
      %s427 = smul.addr %s426, 8
      %s428 = scalar_lea.vmem %s1, %s427
      %p429 = scmp.lt.s32.totalorder %s23, 1
      %s430 = scalar_select %p429, %s23, 1
      %s431 = smul.addr %s430, 2
      %s432 = smul.addr %s431, 4
      %s433 = scalar_lea.vmem %s12, %s432
      %v435 = vld [vmem:[%s423] sm:$0xff]
      %v436 = vld [vmem:[%s423 + $0x8] sm:$0xff]
      %v437 = vld [vmem:[%s428] sm:$0xff]
      %v438 = vld [vmem:[%s428 + $0x8] sm:$0xff]
      %v439 = vlaneseq
      %v440 = vand.u32 %v439, 127
      %v441 = vadd.s32 %v440, 128
      %vm442 = vcmp.lt.s32.totalorder %v440, 0
      %v443 = vsub.s32 0, %v440
      %v444 = vsel %vm442, %v443, %v440
      %v445 = vshrl.u32 %v444, 4
      %v446 = vand.u32 %v444, 15
      %v447 = vsub.s32 0, %v446
      %v448 = vsel %vm442, %v447, %v446
      %vm449 = vcmp.lt.s32.totalorder %v441, 0
      %v450 = vsub.s32 0, %v441
      %v451 = vsel %vm449, %v450, %v441
      %v452 = vshrl.u32 %v451, 4
      %v453 = vand.u32 %v451, 15
      %v454 = vsub.s32 0, %v453
      %v455 = vsel %vm449, %v454, %v453
      %vm456 = vcmp.ne.s32.totalorder %v448, 0
      %vm457 = vcmp.ne.s32.totalorder %v455, 0
      %vm458 = vcmp.lt.s32.totalorder %v448, 0
      %vm459 = vcmp.lt.s32.totalorder %v455, 0
      %vm460 = vmand %vm458, %vm456
      %vm461 = vmand %vm459, %vm457
      %v462 = vadd.s32 %v448, 16
      %v463 = vadd.s32 %v455, 16
      %v464 = vsel %vm460, %v462, %v448
      %v465 = vsel %vm461, %v463, %v455
      %vm466 = vcmp.gt.s32.totalorder %v464, 0
      %vm467 = vcmp.gt.s32.totalorder %v465, 0
      %vm468 = vcmp.lt.s32.totalorder %v464, 15
      %vm469 = vcmp.lt.s32.totalorder %v465, 15
      %470 = vst [vmem:[#allocation2] sm:$0xff] 0.0
      %471 = vst [vmem:[#allocation2 + $0x18] sm:$0xff] 0.0
      %472 = vst [vmem:[#allocation3] sm:$0xff] 0.0
      %473 = vst [vmem:[#allocation3 + $0x18] sm:$0xff] 0.0
      %v474 = vsub.f32 %v435, %v437
      %v475 = vsub.f32 %v436, %v438
      %v476 = vand.u32 2147483647, %v474
      %v477 = vand.u32 2147483647, %v475
      %478 = vst [vmem:[#allocation2 + $0x8] sm:$0xff] %v476
      %479 = vst [vmem:[#allocation2 + $0x10] sm:$0xff] %v477
      %v480 = vld [vmem:[#allocation2] sm:$0xff]
      %v481 = vld [vmem:[#allocation2 + $0x8] sm:$0xff]
      %v482 = vld [vmem:[#allocation2 + $0x10] sm:$0xff]
      %v483 = vsel %vm466, 1, 0
      %v484 = vsel %vm467, 1, 0
      %vm485 = vcmp.eq.s32.totalorder %v483, 1
      %vm486 = vcmp.eq.s32.totalorder %v484, 1
      %490 = vrot.lane.b32.xlu0 %v480, 17
      %v491 = vpop.permute.xlu0 %490
      %492 = vrot.lane.b32.xlu0 %v481, 17
      %v493 = vpop.permute.xlu0 %492
      %494 = vrot.lane.b32.xlu0 %v482, 17
      %v495 = vpop.permute.xlu0 %494
      %vm496 = vcmask 138240
      %v497 = vsel %vm496, %v491, %v493
      %v498 = vsel %vm496, %v493, %v495
      %v501 = vsel %vm485, %v497, 0.0
      %v502 = vsel %vm486, %v498, 0.0
      %v503 = vsel %vm468, 1, 0
      %v504 = vsel %vm469, 1, 0
      %vm505 = vcmp.eq.s32.totalorder %v503, 1
      %vm506 = vcmp.eq.s32.totalorder %v504, 1
      %507 = vrot.lane.b32.xlu0 %v480, 15
      %v508 = vpop.permute.xlu0 %507
      %509 = vrot.lane.b32.xlu0 %v481, 15
      %v510 = vpop.permute.xlu0 %509
      %511 = vrot.lane.b32.xlu0 %v482, 15
      %v512 = vpop.permute.xlu0 %511
      %vm513 = vcmask 121856
      %v514 = vsel %vm513, %v508, %v510
      %v515 = vsel %vm513, %v510, %v512
      %v518 = vsel %vm505, %v514, 0.0
      %v519 = vsel %vm506, %v515, 0.0
      %520 = vrot.lane.b32.xlu0 %v480, 1
      %v521 = vpop.permute.xlu0 %520
      %522 = vrot.lane.b32.xlu0 %v481, 1
      %v523 = vpop.permute.xlu0 %522
      %524 = vrot.lane.b32.xlu0 %v482, 1
      %v525 = vpop.permute.xlu0 %524
      %vm526 = vcmask 7168
      %v527 = vsel %vm526, %v521, %v523
      %v528 = vsel %vm526, %v523, %v525
      %v531 = vsel %vm485, %v527, 0.0
      %v532 = vsel %vm486, %v528, 0.0
      %v533 = vld [vmem:[#allocation2 + $0x8] sm:$0xff]
      %v534 = vld [vmem:[#allocation2 + $0x10] sm:$0xff]
      %v535 = vld [vmem:[#allocation2 + $0x18] sm:$0xff]
      %539 = vrot.lane.b32.xlu0 %v533, 127
      %v540 = vpop.permute.xlu0 %539
      %541 = vrot.lane.b32.xlu0 %v534, 127
      %v542 = vpop.permute.xlu0 %541
      %543 = vrot.lane.b32.xlu0 %v535, 127
      %v544 = vpop.permute.xlu0 %543
      %vm545 = vcmask 1039360
      %v546 = vsel %vm545, %v540, %v542
      %v547 = vsel %vm545, %v542, %v544
      %v550 = vsel %vm505, %v546, 0.0
      %v551 = vsel %vm506, %v547, 0.0
      %552 = vrot.lane.b32.xlu0 %v533, 113
      %v553 = vpop.permute.xlu0 %552
      %554 = vrot.lane.b32.xlu0 %v534, 113
      %v555 = vpop.permute.xlu0 %554
      %556 = vrot.lane.b32.xlu0 %v535, 113
      %v557 = vpop.permute.xlu0 %556
      %vm558 = vcmask 924672
      %v559 = vsel %vm558, %v553, %v555
      %v560 = vsel %vm558, %v555, %v557
      %v563 = vsel %vm485, %v559, 0.0
      %v564 = vsel %vm486, %v560, 0.0
      %565 = vrot.lane.b32.xlu0 %v533, 111
      %v566 = vpop.permute.xlu0 %565
      %567 = vrot.lane.b32.xlu0 %v534, 111
      %v568 = vpop.permute.xlu0 %567
      %569 = vrot.lane.b32.xlu0 %v535, 111
      %v570 = vpop.permute.xlu0 %569
      %vm571 = vcmask 908288
      %v572 = vsel %vm571, %v566, %v568
      %v573 = vsel %vm571, %v568, %v570
      %v576 = vsel %vm505, %v572, 0.0
      %v577 = vsel %vm506, %v573, 0.0
      %578 = vrot.lane.b32.xlu0 %v480, 16
      %v579 = vpop.permute.xlu0 %578
      %580 = vrot.lane.b32.xlu0 %v481, 16
      %v581 = vpop.permute.xlu0 %580
      %582 = vrot.lane.b32.xlu0 %v482, 16
      %v583 = vpop.permute.xlu0 %582
      %vm584 = vcmask 130048
      %v585 = vsel %vm584, %v579, %v581
      %v586 = vsel %vm584, %v581, %v583
      %589 = vrot.lane.b32.xlu0 %v533, 112
      %v590 = vpop.permute.xlu0 %589
      %591 = vrot.lane.b32.xlu0 %v534, 112
      %v592 = vpop.permute.xlu0 %591
      %593 = vrot.lane.b32.xlu0 %v535, 112
      %v594 = vpop.permute.xlu0 %593
      %vm595 = vcmask 916480
      %v596 = vsel %vm595, %v590, %v592
      %v597 = vsel %vm595, %v592, %v594
      %v600 = vpack.c.bf16 %v585, %v501
      %v601 = vpack.c.bf16 %v586, %v502
      %v602 = vpack.c.bf16 %v531, %v518
      %v603 = vpack.c.bf16 %v532, %v519
      %v604 = vpack.c.bf16 %v550, %v481
      %v605 = vpack.c.bf16 %v551, %v482
      %v606 = vpack.c.bf16 %v596, %v563
      %v607 = vpack.c.bf16 %v597, %v564
      %v608 = vpack.c.bf16 %v576, %v576
      %v609 = vpack.c.bf16 %v577, %v577
      %v610 = vld [vmem:[%s2] sm:$0xf]
      %v611 = vld [vmem:[%s3] sm:$0xff]
      %613 = vset.pattern.permute.xlu0 0
      %614 = vperm.xlu0 %613, %v611
      %v615 = vpop.permute.xlu0 %614
      %vm617 = vcmask 588800
      %v619 = vsel %vm617, %v610, 0
      %vm621 = vcmask 1043456
      %v623 = vsel %vm621, %v608, 0
      %v626 = vsel %vm621, %v609, 0
      %628 = vmatpush.bf16.msra.mxu0 0
      %629 = vmatpush.bf16.msra.mxu0 0
      %630 = vmatpush.bf16.msra.mxu0 0
      %631 = vmatpush.bf16.msra.mxu0 %v623
      %632 = vmatpush.bf16.msra.mxu0 %v606
      %633 = vmatpush.bf16.msra.mxu0 %v604
      %634 = vmatpush.bf16.msra.mxu0 %v602
      %635 = vmatpush.bf16.msra.mxu0 %v600
      %636 = vmatmul.bf16.gmra.mxu0 %v619
      %v637 = vpop.f32.mrf.mxu0
      %v638 = vadd.f32 %v615, %v637
      %v639 = vpop.f32.mrf.mxu0
      %640 = vdwg.mxu0
      %641 = vmatpush.bf16.msra.mxu0 0
      %642 = vmatpush.bf16.msra.mxu0 0
      %643 = vmatpush.bf16.msra.mxu0 0
      %644 = vmatpush.bf16.msra.mxu0 %v626
      %645 = vmatpush.bf16.msra.mxu0 %v607
      %646 = vmatpush.bf16.msra.mxu0 %v605
      %647 = vmatpush.bf16.msra.mxu0 %v603
      %648 = vmatpush.bf16.msra.mxu0 %v601
      %649 = vmatmul.bf16.gmra.mxu0 %v619
      %v650 = vpop.f32.mrf.mxu0
      %v651 = vadd.f32 %v615, %v650
      %v652 = vpop.f32.mrf.mxu0
      %653 = vdwg.mxu0
      %v654 = vmax.f32 %v638, 0.0
      %v655 = vmax.f32 %v651, 0.0
      %v656 = vadd.f32 %v654, 1.0
      %v657 = vadd.f32 %v655, 1.0
      %v658 = vmul.f32 %v435, %v656
      %v659 = vmul.f32 %v436, %v657
      %660 = vst [vmem:[#allocation2 + $0x8] sm:$0xff] %v658
      %661 = vst [vmem:[#allocation2 + $0x10] sm:$0xff] %v659
      %v662 = vmul.f32 %v437, %v656
      %v663 = vmul.f32 %v438, %v657
      %664 = vst [vmem:[#allocation3 + $0x8] sm:$0xff] %v662
      %665 = vst [vmem:[#allocation3 + $0x10] sm:$0xff] %v663
      %v666 = vld [vmem:[#allocation2] sm:$0xff]
      %v667 = vld [vmem:[#allocation2 + $0x8] sm:$0xff]
      %v668 = vld [vmem:[#allocation2 + $0x10] sm:$0xff]
      %672 = vrot.lane.b32.xlu0 %v666, 17
      %v673 = vpop.permute.xlu0 %672
      %674 = vrot.lane.b32.xlu0 %v667, 17
      %v675 = vpop.permute.xlu0 %674
      %676 = vrot.lane.b32.xlu0 %v668, 17
      %v677 = vpop.permute.xlu0 %676
      %v678 = vsel %vm496, %v673, %v675
      %v679 = vsel %vm496, %v675, %v677
      %v682 = vsel %vm485, %v678, 0.0
      %v683 = vsel %vm486, %v679, 0.0
      %684 = vrot.lane.b32.xlu0 %v666, 15
      %v685 = vpop.permute.xlu0 %684
      %686 = vrot.lane.b32.xlu0 %v667, 15
      %v687 = vpop.permute.xlu0 %686
      %688 = vrot.lane.b32.xlu0 %v668, 15
      %v689 = vpop.permute.xlu0 %688
      %v690 = vsel %vm513, %v685, %v687
      %v691 = vsel %vm513, %v687, %v689
      %v694 = vsel %vm505, %v690, 0.0
      %v695 = vsel %vm506, %v691, 0.0
      %696 = vrot.lane.b32.xlu0 %v666, 1
      %v697 = vpop.permute.xlu0 %696
      %698 = vrot.lane.b32.xlu0 %v667, 1
      %v699 = vpop.permute.xlu0 %698
      %700 = vrot.lane.b32.xlu0 %v668, 1
      %v701 = vpop.permute.xlu0 %700
      %v702 = vsel %vm526, %v697, %v699
      %v703 = vsel %vm526, %v699, %v701
      %v706 = vsel %vm485, %v702, 0.0
      %v707 = vsel %vm486, %v703, 0.0
      %v708 = vld [vmem:[#allocation2 + $0x8] sm:$0xff]
      %v709 = vld [vmem:[#allocation2 + $0x10] sm:$0xff]
      %v710 = vld [vmem:[#allocation2 + $0x18] sm:$0xff]
      %714 = vrot.lane.b32.xlu0 %v708, 127
      %v715 = vpop.permute.xlu0 %714
      %716 = vrot.lane.b32.xlu0 %v709, 127
      %v717 = vpop.permute.xlu0 %716
      %718 = vrot.lane.b32.xlu0 %v710, 127
      %v719 = vpop.permute.xlu0 %718
      %v720 = vsel %vm545, %v715, %v717
      %v721 = vsel %vm545, %v717, %v719
      %v724 = vsel %vm505, %v720, 0.0
      %v725 = vsel %vm506, %v721, 0.0
      %726 = vrot.lane.b32.xlu0 %v708, 113
      %v727 = vpop.permute.xlu0 %726
      %728 = vrot.lane.b32.xlu0 %v709, 113
      %v729 = vpop.permute.xlu0 %728
      %730 = vrot.lane.b32.xlu0 %v710, 113
      %v731 = vpop.permute.xlu0 %730
      %v732 = vsel %vm558, %v727, %v729
      %v733 = vsel %vm558, %v729, %v731
      %v736 = vsel %vm485, %v732, 0.0
      %v737 = vsel %vm486, %v733, 0.0
      %738 = vrot.lane.b32.xlu0 %v708, 111
      %v739 = vpop.permute.xlu0 %738
      %740 = vrot.lane.b32.xlu0 %v709, 111
      %v741 = vpop.permute.xlu0 %740
      %742 = vrot.lane.b32.xlu0 %v710, 111
      %v743 = vpop.permute.xlu0 %742
      %v744 = vsel %vm571, %v739, %v741
      %v745 = vsel %vm571, %v741, %v743
      %v748 = vsel %vm505, %v744, 0.0
      %v749 = vsel %vm506, %v745, 0.0
      %750 = vrot.lane.b32.xlu0 %v666, 16
      %v751 = vpop.permute.xlu0 %750
      %752 = vrot.lane.b32.xlu0 %v667, 16
      %v753 = vpop.permute.xlu0 %752
      %754 = vrot.lane.b32.xlu0 %v668, 16
      %v755 = vpop.permute.xlu0 %754
      %v756 = vsel %vm584, %v751, %v753
      %v757 = vsel %vm584, %v753, %v755
      %760 = vrot.lane.b32.xlu0 %v708, 112
      %v761 = vpop.permute.xlu0 %760
      %762 = vrot.lane.b32.xlu0 %v709, 112
      %v763 = vpop.permute.xlu0 %762
      %764 = vrot.lane.b32.xlu0 %v710, 112
      %v765 = vpop.permute.xlu0 %764
      %v766 = vsel %vm595, %v761, %v763
      %v767 = vsel %vm595, %v763, %v765
      %v770 = vpack.c.bf16 %v756, %v682
      %v771 = vpack.c.bf16 %v757, %v683
      %v772 = vpack.c.bf16 %v706, %v694
      %v773 = vpack.c.bf16 %v707, %v695
      %v774 = vpack.c.bf16 %v724, %v667
      %v775 = vpack.c.bf16 %v725, %v668
      %v776 = vpack.c.bf16 %v766, %v736
      %v777 = vpack.c.bf16 %v767, %v737
      %v778 = vpack.c.bf16 %v748, %v748
      %v779 = vpack.c.bf16 %v749, %v749
      %v780 = vld [vmem:[%s4] sm:$0xf]
      %v781 = vld [vmem:[%s5] sm:$0xff]
      %783 = vset.pattern.permute.xlu0 0
      %784 = vperm.xlu0 %783, %v781
      %v785 = vpop.permute.xlu0 %784
      %v788 = vsel %vm617, %v780, 0
      %v791 = vsel %vm621, %v778, 0
      %v794 = vsel %vm621, %v779, 0
      %796 = vmatpush.bf16.msra.mxu0 0
      %797 = vmatpush.bf16.msra.mxu0 0
      %798 = vmatpush.bf16.msra.mxu0 0
      %799 = vmatpush.bf16.msra.mxu0 %v791
      %800 = vmatpush.bf16.msra.mxu0 %v776
      %801 = vmatpush.bf16.msra.mxu0 %v774
      %802 = vmatpush.bf16.msra.mxu0 %v772
      %803 = vmatpush.bf16.msra.mxu0 %v770
      %804 = vmatmul.bf16.gmra.mxu0 %v788
      %v805 = vpop.f32.mrf.mxu0
      %v806 = vadd.f32 %v785, %v805
      %v807 = vpop.f32.mrf.mxu0
      %808 = vdwg.mxu0
      %809 = vmatpush.bf16.msra.mxu0 0
      %810 = vmatpush.bf16.msra.mxu0 0
      %811 = vmatpush.bf16.msra.mxu0 0
      %812 = vmatpush.bf16.msra.mxu0 %v794
      %813 = vmatpush.bf16.msra.mxu0 %v777
      %814 = vmatpush.bf16.msra.mxu0 %v775
      %815 = vmatpush.bf16.msra.mxu0 %v773
      %816 = vmatpush.bf16.msra.mxu0 %v771
      %817 = vmatmul.bf16.gmra.mxu0 %v788
      %v818 = vpop.f32.mrf.mxu0
      %v819 = vadd.f32 %v785, %v818
      %v820 = vpop.f32.mrf.mxu0
      %821 = vdwg.mxu0
      %v822 = vmax.f32 %v806, 0.0
      %v823 = vmax.f32 %v819, 0.0
      %v824 = vld [vmem:[#allocation3] sm:$0xff]
      %v825 = vld [vmem:[#allocation3 + $0x8] sm:$0xff]
      %v826 = vld [vmem:[#allocation3 + $0x10] sm:$0xff]
      %830 = vrot.lane.b32.xlu0 %v824, 17
      %v831 = vpop.permute.xlu0 %830
      %832 = vrot.lane.b32.xlu0 %v825, 17
      %v833 = vpop.permute.xlu0 %832
      %834 = vrot.lane.b32.xlu0 %v826, 17
      %v835 = vpop.permute.xlu0 %834
      %v836 = vsel %vm496, %v831, %v833
      %v837 = vsel %vm496, %v833, %v835
      %v840 = vsel %vm485, %v836, 0.0
      %v841 = vsel %vm486, %v837, 0.0
      %842 = vrot.lane.b32.xlu0 %v824, 15
      %v843 = vpop.permute.xlu0 %842
      %844 = vrot.lane.b32.xlu0 %v825, 15
      %v845 = vpop.permute.xlu0 %844
      %846 = vrot.lane.b32.xlu0 %v826, 15
      %v847 = vpop.permute.xlu0 %846
      %v848 = vsel %vm513, %v843, %v845
      %v849 = vsel %vm513, %v845, %v847
      %v852 = vsel %vm505, %v848, 0.0
      %v853 = vsel %vm506, %v849, 0.0
      %854 = vrot.lane.b32.xlu0 %v824, 1
      %v855 = vpop.permute.xlu0 %854
      %856 = vrot.lane.b32.xlu0 %v825, 1
      %v857 = vpop.permute.xlu0 %856
      %858 = vrot.lane.b32.xlu0 %v826, 1
      %v859 = vpop.permute.xlu0 %858
      %v860 = vsel %vm526, %v855, %v857
      %v861 = vsel %vm526, %v857, %v859
      %v864 = vsel %vm485, %v860, 0.0
      %v865 = vsel %vm486, %v861, 0.0
      %v866 = vld [vmem:[#allocation3 + $0x8] sm:$0xff]
      %v867 = vld [vmem:[#allocation3 + $0x10] sm:$0xff]
      %v868 = vld [vmem:[#allocation3 + $0x18] sm:$0xff]
      %872 = vrot.lane.b32.xlu0 %v866, 127
      %v873 = vpop.permute.xlu0 %872
      %874 = vrot.lane.b32.xlu0 %v867, 127
      %v875 = vpop.permute.xlu0 %874
      %876 = vrot.lane.b32.xlu0 %v868, 127
      %v877 = vpop.permute.xlu0 %876
      %v878 = vsel %vm545, %v873, %v875
      %v879 = vsel %vm545, %v875, %v877
      %v882 = vsel %vm505, %v878, 0.0
      %v883 = vsel %vm506, %v879, 0.0
      %884 = vrot.lane.b32.xlu0 %v866, 113
      %v885 = vpop.permute.xlu0 %884
      %886 = vrot.lane.b32.xlu0 %v867, 113
      %v887 = vpop.permute.xlu0 %886
      %888 = vrot.lane.b32.xlu0 %v868, 113
      %v889 = vpop.permute.xlu0 %888
      %v890 = vsel %vm558, %v885, %v887
      %v891 = vsel %vm558, %v887, %v889
      %v894 = vsel %vm485, %v890, 0.0
      %v895 = vsel %vm486, %v891, 0.0
      %896 = vrot.lane.b32.xlu0 %v866, 111
      %v897 = vpop.permute.xlu0 %896
      %898 = vrot.lane.b32.xlu0 %v867, 111
      %v899 = vpop.permute.xlu0 %898
      %900 = vrot.lane.b32.xlu0 %v868, 111
      %v901 = vpop.permute.xlu0 %900
      %v902 = vsel %vm571, %v897, %v899
      %v903 = vsel %vm571, %v899, %v901
      %v906 = vsel %vm505, %v902, 0.0
      %v907 = vsel %vm506, %v903, 0.0
      %908 = vrot.lane.b32.xlu0 %v824, 16
      %v909 = vpop.permute.xlu0 %908
      %910 = vrot.lane.b32.xlu0 %v825, 16
      %v911 = vpop.permute.xlu0 %910
      %912 = vrot.lane.b32.xlu0 %v826, 16
      %v913 = vpop.permute.xlu0 %912
      %v914 = vsel %vm584, %v909, %v911
      %v915 = vsel %vm584, %v911, %v913
      %918 = vrot.lane.b32.xlu0 %v866, 112
      %v919 = vpop.permute.xlu0 %918
      %920 = vrot.lane.b32.xlu0 %v867, 112
      %v921 = vpop.permute.xlu0 %920
      %922 = vrot.lane.b32.xlu0 %v868, 112
      %v923 = vpop.permute.xlu0 %922
      %v924 = vsel %vm595, %v919, %v921
      %v925 = vsel %vm595, %v921, %v923
      %v928 = vpack.c.bf16 %v914, %v840
      %v929 = vpack.c.bf16 %v915, %v841
      %v930 = vpack.c.bf16 %v864, %v852
      %v931 = vpack.c.bf16 %v865, %v853
      %v932 = vpack.c.bf16 %v882, %v825
      %v933 = vpack.c.bf16 %v883, %v826
      %v934 = vpack.c.bf16 %v924, %v894
      %v935 = vpack.c.bf16 %v925, %v895
      %v936 = vpack.c.bf16 %v906, %v906
      %v937 = vpack.c.bf16 %v907, %v907
      %v938 = vld [vmem:[%s6] sm:$0xf]
      %v939 = vld [vmem:[%s7] sm:$0xff]
      %941 = vset.pattern.permute.xlu0 0
      %942 = vperm.xlu0 %941, %v939
      %v943 = vpop.permute.xlu0 %942
      %v946 = vsel %vm617, %v938, 0
      %v949 = vsel %vm621, %v936, 0
      %v952 = vsel %vm621, %v937, 0
      %954 = vmatpush.bf16.msra.mxu0 0
      %955 = vmatpush.bf16.msra.mxu0 0
      %956 = vmatpush.bf16.msra.mxu0 0
      %957 = vmatpush.bf16.msra.mxu0 %v949
      %958 = vmatpush.bf16.msra.mxu0 %v934
      %959 = vmatpush.bf16.msra.mxu0 %v932
      %960 = vmatpush.bf16.msra.mxu0 %v930
      %961 = vmatpush.bf16.msra.mxu0 %v928
      %962 = vmatmul.bf16.gmra.mxu0 %v946
      %v963 = vpop.f32.mrf.mxu0
      %v964 = vadd.f32 %v943, %v963
      %v965 = vpop.f32.mrf.mxu0
      %966 = vdwg.mxu0
      %967 = vmatpush.bf16.msra.mxu0 0
      %968 = vmatpush.bf16.msra.mxu0 0
      %969 = vmatpush.bf16.msra.mxu0 0
      %970 = vmatpush.bf16.msra.mxu0 %v952
      %971 = vmatpush.bf16.msra.mxu0 %v935
      %972 = vmatpush.bf16.msra.mxu0 %v933
      %973 = vmatpush.bf16.msra.mxu0 %v931
      %974 = vmatpush.bf16.msra.mxu0 %v929
      %975 = vmatmul.bf16.gmra.mxu0 %v946
      %v976 = vpop.f32.mrf.mxu0
      %v977 = vadd.f32 %v943, %v976
      %v978 = vpop.f32.mrf.mxu0
      %979 = vdwg.mxu0
      %v980 = vmax.f32 %v964, 0.0
      %v981 = vmax.f32 %v977, 0.0
      %982 = vst [vmem:[#allocation2 + $0x8] sm:$0xff] %v822
      %983 = vst [vmem:[#allocation2 + $0x10] sm:$0xff] %v823
      %984 = vst [vmem:[#allocation3 + $0x8] sm:$0xff] %v980
      %985 = vst [vmem:[#allocation3 + $0x10] sm:$0xff] %v981
      %v986 = vld [vmem:[#allocation2] sm:$0xff]
      %v987 = vld [vmem:[#allocation2 + $0x8] sm:$0xff]
      %v988 = vld [vmem:[#allocation2 + $0x10] sm:$0xff]
      %992 = vrot.lane.b32.xlu0 %v986, 17
      %v993 = vpop.permute.xlu0 %992
      %994 = vrot.lane.b32.xlu0 %v987, 17
      %v995 = vpop.permute.xlu0 %994
      %996 = vrot.lane.b32.xlu0 %v988, 17
      %v997 = vpop.permute.xlu0 %996
      %v998 = vsel %vm496, %v993, %v995
      %v999 = vsel %vm496, %v995, %v997
      %v1002 = vsel %vm485, %v998, 0.0
      %v1003 = vsel %vm486, %v999, 0.0
      %v1004 = vld [vmem:[#allocation3] sm:$0xff]
      %v1005 = vld [vmem:[#allocation3 + $0x8] sm:$0xff]
      %v1006 = vld [vmem:[#allocation3 + $0x10] sm:$0xff]
      %1010 = vrot.lane.b32.xlu0 %v1004, 17
      %v1011 = vpop.permute.xlu0 %1010
      %1012 = vrot.lane.b32.xlu0 %v1005, 17
      %v1013 = vpop.permute.xlu0 %1012
      %1014 = vrot.lane.b32.xlu0 %v1006, 17
      %v1015 = vpop.permute.xlu0 %1014
      %v1016 = vsel %vm496, %v1011, %v1013
      %v1017 = vsel %vm496, %v1013, %v1015
      %v1020 = vsel %vm485, %v1016, 0.0
      %v1021 = vsel %vm486, %v1017, 0.0
      %1022 = vrot.lane.b32.xlu0 %v986, 15
      %v1023 = vpop.permute.xlu0 %1022
      %1024 = vrot.lane.b32.xlu0 %v987, 15
      %v1025 = vpop.permute.xlu0 %1024
      %1026 = vrot.lane.b32.xlu0 %v988, 15
      %v1027 = vpop.permute.xlu0 %1026
      %v1028 = vsel %vm513, %v1023, %v1025
      %v1029 = vsel %vm513, %v1025, %v1027
      %v1032 = vsel %vm505, %v1028, 0.0
      %v1033 = vsel %vm506, %v1029, 0.0
      %1034 = vrot.lane.b32.xlu0 %v1004, 15
      %v1035 = vpop.permute.xlu0 %1034
      %1036 = vrot.lane.b32.xlu0 %v1005, 15
      %v1037 = vpop.permute.xlu0 %1036
      %1038 = vrot.lane.b32.xlu0 %v1006, 15
      %v1039 = vpop.permute.xlu0 %1038
      %v1040 = vsel %vm513, %v1035, %v1037
      %v1041 = vsel %vm513, %v1037, %v1039
      %v1044 = vsel %vm505, %v1040, 0.0
      %v1045 = vsel %vm506, %v1041, 0.0
      %1046 = vrot.lane.b32.xlu0 %v986, 1
      %v1047 = vpop.permute.xlu0 %1046
      %1048 = vrot.lane.b32.xlu0 %v987, 1
      %v1049 = vpop.permute.xlu0 %1048
      %1050 = vrot.lane.b32.xlu0 %v988, 1
      %v1051 = vpop.permute.xlu0 %1050
      %v1052 = vsel %vm526, %v1047, %v1049
      %v1053 = vsel %vm526, %v1049, %v1051
      %v1056 = vsel %vm485, %v1052, 0.0
      %v1057 = vsel %vm486, %v1053, 0.0
      %1058 = vrot.lane.b32.xlu0 %v1004, 1
      %v1059 = vpop.permute.xlu0 %1058
      %1060 = vrot.lane.b32.xlu0 %v1005, 1
      %v1061 = vpop.permute.xlu0 %1060
      %1062 = vrot.lane.b32.xlu0 %v1006, 1
      %v1063 = vpop.permute.xlu0 %1062
      %v1064 = vsel %vm526, %v1059, %v1061
      %v1065 = vsel %vm526, %v1061, %v1063
      %v1068 = vsel %vm485, %v1064, 0.0
      %v1069 = vsel %vm486, %v1065, 0.0
      %v1070 = vld [vmem:[#allocation2 + $0x8] sm:$0xff]
      %v1071 = vld [vmem:[#allocation2 + $0x10] sm:$0xff]
      %v1072 = vld [vmem:[#allocation2 + $0x18] sm:$0xff]
      %1076 = vrot.lane.b32.xlu0 %v1070, 127
      %v1077 = vpop.permute.xlu0 %1076
      %1078 = vrot.lane.b32.xlu0 %v1071, 127
      %v1079 = vpop.permute.xlu0 %1078
      %1080 = vrot.lane.b32.xlu0 %v1072, 127
      %v1081 = vpop.permute.xlu0 %1080
      %v1082 = vsel %vm545, %v1077, %v1079
      %v1083 = vsel %vm545, %v1079, %v1081
      %v1086 = vsel %vm505, %v1082, 0.0
      %v1087 = vsel %vm506, %v1083, 0.0
      %v1088 = vld [vmem:[#allocation3 + $0x8] sm:$0xff]
      %v1089 = vld [vmem:[#allocation3 + $0x10] sm:$0xff]
      %v1090 = vld [vmem:[#allocation3 + $0x18] sm:$0xff]
      %1094 = vrot.lane.b32.xlu0 %v1088, 127
      %v1095 = vpop.permute.xlu0 %1094
      %1096 = vrot.lane.b32.xlu0 %v1089, 127
      %v1097 = vpop.permute.xlu0 %1096
      %1098 = vrot.lane.b32.xlu0 %v1090, 127
      %v1099 = vpop.permute.xlu0 %1098
      %v1100 = vsel %vm545, %v1095, %v1097
      %v1101 = vsel %vm545, %v1097, %v1099
      %v1104 = vsel %vm505, %v1100, 0.0
      %v1105 = vsel %vm506, %v1101, 0.0
      %1106 = vrot.lane.b32.xlu0 %v1070, 113
      %v1107 = vpop.permute.xlu0 %1106
      %1108 = vrot.lane.b32.xlu0 %v1071, 113
      %v1109 = vpop.permute.xlu0 %1108
      %1110 = vrot.lane.b32.xlu0 %v1072, 113
      %v1111 = vpop.permute.xlu0 %1110
      %v1112 = vsel %vm558, %v1107, %v1109
      %v1113 = vsel %vm558, %v1109, %v1111
      %v1116 = vsel %vm485, %v1112, 0.0
      %v1117 = vsel %vm486, %v1113, 0.0
      %1118 = vrot.lane.b32.xlu0 %v1088, 113
      %v1119 = vpop.permute.xlu0 %1118
      %1120 = vrot.lane.b32.xlu0 %v1089, 113
      %v1121 = vpop.permute.xlu0 %1120
      %1122 = vrot.lane.b32.xlu0 %v1090, 113
      %v1123 = vpop.permute.xlu0 %1122
      %v1124 = vsel %vm558, %v1119, %v1121
      %v1125 = vsel %vm558, %v1121, %v1123
      %v1128 = vsel %vm485, %v1124, 0.0
      %v1129 = vsel %vm486, %v1125, 0.0
      %1130 = vrot.lane.b32.xlu0 %v1070, 111
      %v1131 = vpop.permute.xlu0 %1130
      %1132 = vrot.lane.b32.xlu0 %v1071, 111
      %v1133 = vpop.permute.xlu0 %1132
      %1134 = vrot.lane.b32.xlu0 %v1072, 111
      %v1135 = vpop.permute.xlu0 %1134
      %v1136 = vsel %vm571, %v1131, %v1133
      %v1137 = vsel %vm571, %v1133, %v1135
      %v1140 = vsel %vm505, %v1136, 0.0
      %v1141 = vsel %vm506, %v1137, 0.0
      %1142 = vrot.lane.b32.xlu0 %v1088, 111
      %v1143 = vpop.permute.xlu0 %1142
      %1144 = vrot.lane.b32.xlu0 %v1089, 111
      %v1145 = vpop.permute.xlu0 %1144
      %1146 = vrot.lane.b32.xlu0 %v1090, 111
      %v1147 = vpop.permute.xlu0 %1146
      %v1148 = vsel %vm571, %v1143, %v1145
      %v1149 = vsel %vm571, %v1145, %v1147
      %v1152 = vsel %vm505, %v1148, 0.0
      %v1153 = vsel %vm506, %v1149, 0.0
      %1154 = vrot.lane.b32.xlu0 %v986, 16
      %v1155 = vpop.permute.xlu0 %1154
      %1156 = vrot.lane.b32.xlu0 %v987, 16
      %v1157 = vpop.permute.xlu0 %1156
      %1158 = vrot.lane.b32.xlu0 %v988, 16
      %v1159 = vpop.permute.xlu0 %1158
      %v1160 = vsel %vm584, %v1155, %v1157
      %v1161 = vsel %vm584, %v1157, %v1159
      %1164 = vrot.lane.b32.xlu0 %v1004, 16
      %v1165 = vpop.permute.xlu0 %1164
      %1166 = vrot.lane.b32.xlu0 %v1005, 16
      %v1167 = vpop.permute.xlu0 %1166
      %1168 = vrot.lane.b32.xlu0 %v1006, 16
      %v1169 = vpop.permute.xlu0 %1168
      %v1170 = vsel %vm584, %v1165, %v1167
      %v1171 = vsel %vm584, %v1167, %v1169
      %1174 = vrot.lane.b32.xlu0 %v1070, 112
      %v1175 = vpop.permute.xlu0 %1174
      %1176 = vrot.lane.b32.xlu0 %v1071, 112
      %v1177 = vpop.permute.xlu0 %1176
      %1178 = vrot.lane.b32.xlu0 %v1072, 112
      %v1179 = vpop.permute.xlu0 %1178
      %v1180 = vsel %vm595, %v1175, %v1177
      %v1181 = vsel %vm595, %v1177, %v1179
      %1184 = vrot.lane.b32.xlu0 %v1088, 112
      %v1185 = vpop.permute.xlu0 %1184
      %1186 = vrot.lane.b32.xlu0 %v1089, 112
      %v1187 = vpop.permute.xlu0 %1186
      %1188 = vrot.lane.b32.xlu0 %v1090, 112
      %v1189 = vpop.permute.xlu0 %1188
      %v1190 = vsel %vm595, %v1185, %v1187
      %v1191 = vsel %vm595, %v1187, %v1189
      %v1194 = vpack.c.bf16 %v1020, %v1002
      %v1195 = vpack.c.bf16 %v1021, %v1003
      %v1196 = vpack.c.bf16 %v1170, %v1160
      %v1197 = vpack.c.bf16 %v1171, %v1161
      %v1198 = vpack.c.bf16 %v1044, %v1032
      %v1199 = vpack.c.bf16 %v1045, %v1033
      %v1200 = vpack.c.bf16 %v1068, %v1056
      %v1201 = vpack.c.bf16 %v1069, %v1057
      %v1202 = vpack.c.bf16 %v1005, %v987
      %v1203 = vpack.c.bf16 %v1006, %v988
      %v1204 = vpack.c.bf16 %v1104, %v1086
      %v1205 = vpack.c.bf16 %v1105, %v1087
      %v1206 = vpack.c.bf16 %v1128, %v1116
      %v1207 = vpack.c.bf16 %v1129, %v1117
      %v1208 = vpack.c.bf16 %v1190, %v1180
      %v1209 = vpack.c.bf16 %v1191, %v1181
      %v1210 = vpack.c.bf16 %v1152, %v1140
      %v1211 = vpack.c.bf16 %v1153, %v1141
      %v1212 = vld [vmem:[%s8] sm:$0xff]
      %v1213 = vld [vmem:[%s9] sm:$0xff]
      %1215 = vset.pattern.permute.xlu0 0
      %1216 = vperm.xlu0 %1215, %v1213
      %v1217 = vpop.permute.xlu0 %1216
      %v1220 = vunpack.c.l.b16 %v1212
      %v1221 = vunpack.c.h.b16 %v1212
      %v1222 = vpack.c.b16 %v1220, %v1220
      %v1223 = vpack.c.b16 %v1221, %v1221
      %v1226 = vsel %vm584, %v1223, 0
      %1228 = vmatpush.bf16.msra.mxu0 %v1208
      %1229 = vmatpush.bf16.msra.mxu0 %v1206
      %1230 = vmatpush.bf16.msra.mxu0 %v1204
      %1231 = vmatpush.bf16.msra.mxu0 %v1202
      %1232 = vmatpush.bf16.msra.mxu0 %v1200
      %1233 = vmatpush.bf16.msra.mxu0 %v1198
      %1234 = vmatpush.bf16.msra.mxu0 %v1196
      %1235 = vmatpush.bf16.msra.mxu0 %v1194
      %1236 = vmatmul.bf16.gmra.mxu0 %v1222
      %v1237 = vpop.f32.mrf.mxu0
      %v1238 = vadd.f32 %v1217, %v1237
      %v1239 = vpop.f32.mrf.mxu0
      %1240 = vdwg.mxu0
      %1241 = vmatpush.bf16.msra.mxu0 0
      %1242 = vmatpush.bf16.msra.mxu0 0
      %1243 = vmatpush.bf16.msra.mxu0 0
      %1244 = vmatpush.bf16.msra.mxu0 0
      %1245 = vmatpush.bf16.msra.mxu0 0
      %1246 = vmatpush.bf16.msra.mxu0 0
      %1247 = vmatpush.bf16.msra.mxu0 0
      %1248 = vmatpush.bf16.msra.mxu0 %v1210
      %1249 = vmatmul.bf16.gmra.mxu0 %v1226
      %v1250 = vpop.f32.mrf.mxu0
      %v1251 = vadd.f32 %v1238, %v1250
      %v1252 = vpop.f32.mrf.mxu0
      %1253 = vdwg.mxu0
      %1254 = vmatpush.bf16.msra.mxu0 %v1209
      %1255 = vmatpush.bf16.msra.mxu0 %v1207
      %1256 = vmatpush.bf16.msra.mxu0 %v1205
      %1257 = vmatpush.bf16.msra.mxu0 %v1203
      %1258 = vmatpush.bf16.msra.mxu0 %v1201
      %1259 = vmatpush.bf16.msra.mxu0 %v1199
      %1260 = vmatpush.bf16.msra.mxu0 %v1197
      %1261 = vmatpush.bf16.msra.mxu0 %v1195
      %1262 = vmatmul.bf16.gmra.mxu0 %v1222
      %v1263 = vpop.f32.mrf.mxu0
      %v1264 = vadd.f32 %v1217, %v1263
      %v1265 = vpop.f32.mrf.mxu0
      %1266 = vdwg.mxu0
      %1267 = vmatpush.bf16.msra.mxu0 0
      %1268 = vmatpush.bf16.msra.mxu0 0
      %1269 = vmatpush.bf16.msra.mxu0 0
      %1270 = vmatpush.bf16.msra.mxu0 0
      %1271 = vmatpush.bf16.msra.mxu0 0
      %1272 = vmatpush.bf16.msra.mxu0 0
      %1273 = vmatpush.bf16.msra.mxu0 0
      %1274 = vmatpush.bf16.msra.mxu0 %v1211
      %1275 = vmatmul.bf16.gmra.mxu0 %v1226
      %v1276 = vpop.f32.mrf.mxu0
      %v1277 = vadd.f32 %v1264, %v1276
      %v1278 = vpop.f32.mrf.mxu0
      %1279 = vdwg.mxu0
      %v1280 = vmax.f32 %v1251, 0.0
      %v1281 = vmax.f32 %v1277, 0.0
      %v1282 = vadd.f32 %v1280, %v654
      %v1283 = vadd.f32 %v1281, %v655
      %v1284 = vpack.c.bf16 %v1282, %v1282
      %v1285 = vpack.c.bf16 %v1283, %v1283
      %v1286 = vld [vmem:[%s10] sm:$0x3]
      %v1287 = vld [vmem:[%s11] sm:$0xf]
      %1289 = vset.pattern.permute.xlu0 0
      %1290 = vperm.xlu0 %1289, %v1287
      %v1291 = vpop.permute.xlu0 %1290
      %vm1293 = vcmask 64512
      %v1295 = vsel %vm1293, %v1286, 0
      %v1298 = vsel %vm621, %v1284, 0
      %v1301 = vsel %vm621, %v1285, 0
      %1303 = vmatpush.bf16.msra.mxu0 0
      %1304 = vmatpush.bf16.msra.mxu0 0
      %1305 = vmatpush.bf16.msra.mxu0 0
      %1306 = vmatpush.bf16.msra.mxu0 0
      %1307 = vmatpush.bf16.msra.mxu0 0
      %1308 = vmatpush.bf16.msra.mxu0 0
      %1309 = vmatpush.bf16.msra.mxu0 0
      %1310 = vmatpush.bf16.msra.mxu0 %v1298
      %1311 = vmatmul.bf16.gmra.mxu0 %v1295
      %v1312 = vpop.f32.mrf.mxu0
      %v1313 = vadd.f32 %v1291, %v1312
      %v1314 = vpop.f32.mrf.mxu0
      %1315 = vdwg.mxu0
      %1316 = vmatpush.bf16.msra.mxu0 0
      %1317 = vmatpush.bf16.msra.mxu0 0
      %1318 = vmatpush.bf16.msra.mxu0 0
      %1319 = vmatpush.bf16.msra.mxu0 0
      %1320 = vmatpush.bf16.msra.mxu0 0
      %1321 = vmatpush.bf16.msra.mxu0 0
      %1322 = vmatpush.bf16.msra.mxu0 0
      %1323 = vmatpush.bf16.msra.mxu0 %v1301
      %1324 = vmatmul.bf16.gmra.mxu0 %v1295
      %v1325 = vpop.f32.mrf.mxu0
      %v1326 = vadd.f32 %v1291, %v1325
      %v1327 = vpop.f32.mrf.mxu0
      %1328 = vdwg.mxu0
      %v1329 = vmax.f32 %v1313, 0.0
      %v1330 = vmax.f32 %v1326, 0.0
      %v1333 = vrot.slane %v1330, 4
      %v1334 = vsel %vm621, %v1329, %v1333
      %1336 = vst [vmem:[%s433] sm:$0xff] %v1334
      %p1337 = scmp.lt.s32.totalorder %s23, 1
      %s1338 = scalar_select %p1337, %s23, 1
      %s1339 = smul.addr %s1338, 2
      %s1340 = smul.addr %s1339, 4
      %s1341 = scalar_lea.vmem %s12, %s1340
      // Predicated region
      $region69: #{tfim_forward.1} parent=67 // pred_check
        %p1342 = pneg %p303
      $region70: #{tfim_forward.1} parent=67 // pred_check_branch
        %1344 = sbr.rel (%p1342) target = $region72
      $region71: #{tfim_forward.1} parent=67 // pred_region
        _
      $region72: #{tfim_forward.1} parent=67 // pred_fallthru
        _
    $region68: #{tfim_forward.1} parent=5 // pred_fallthru
      _
    %p1345 = scmp.le.s32.totalorder 2, %s18
    // Predicated region
    $region73: #{tfim_forward.1} parent=5 // pred_check
      %p1346 = pneg %p1345
    $region74: #{tfim_forward.1} parent=5 // pred_check_branch
      %1348 = sbr.rel (%p1346) target = $region76
    $region75: #{tfim_forward.1} parent=5 // pred_region
      %s1349 = ssub.s32 %s18, 2
      // Predicated region
      $region77: #{tfim_forward.1} parent=75 // pred_check
        %p1350 = pneg %p309
      $region78: #{tfim_forward.1} parent=75 // pred_check_branch
        %1352 = sbr.rel (%p1350) target = $region80
      $region79: #{tfim_forward.1} parent=75 // pred_region
        %p1353 = scmp.lt.s32.totalorder %s24, 1
        %s1354 = scalar_select %p1353, %s24, 1
        %s1355 = smul.addr %s1354, 2
        %s1356 = smul.addr %s1355, 4
        %s1357 = scalar_lea.vmem %s12, %s1356
      $region80: #{tfim_forward.1} parent=75 // pred_fallthru
        _
    $region76: #{tfim_forward.1} parent=5 // pred_fallthru
      _
  $region6: #{tfim_forward.1} parent=0 // loop_footer
    %s22 = sadd.s32 1, %s18
  $region7: #{tfim_forward.1} parent=0 // loop_footer_branch
    %17 = sbr.rel target = $region3
  $region8: #{tfim_forward.1} parent=0 // loop_exit
    _

</llo_original>
